<compile_context>
chip_gen: v6e
topology: v6e:2x2x1
jax: 0.10.0
libtpu: 0.0.40
codegen_flags: <defaults>
</compile_context>

<pallas_src>
import math
import functools

import jax
import jax.numpy as jnp
from jax.experimental import pallas as pl
from jax.experimental.pallas import tpu as pltpu


def _attention_pool_kernel(x_ref, pos_ref, wq_ref, wk_ref, wv_ref,
                           bq_ref, bk_ref, bv_ref, wc_ref, bc_ref, o_ref,
                           *, num_heads, ch, seq_len, btile, mm_dtype):
    # x_ref:   (Btile, c, HW)   batch tile, flattened spatial
    # pos_ref: (c, L)           positional embeddings, L = HW + 1
    # wq/wk/wv:(c, c)  bq/bk/bv:(c, 1)     head-major reordered qkv 1x1 conv
    # wc_ref:  (out, c) bc_ref:(out, 1)    output 1x1 conv
    # o_ref:   (Btile, 1, out)
    c = num_heads * ch

    # Channel-major view: (c, Btile, HW)
    xs = jnp.transpose(x_ref[...], (1, 0, 2))
    mean = jnp.mean(xs, axis=-1, keepdims=True)                    # (c, Btile, 1)
    pos = pos_ref[...]                                             # (c, L)

    # xc = cat([mean, x], lanes) + pos_emb, built in registers (no scratch stores).
    xc3 = jnp.concatenate([mean, xs], axis=-1) + pos[:, None, :]   # (c, Btile, L)
    xc = xc3.reshape(c, btile * seq_len)                           # batch folded onto lanes

    xc_mm = xc.astype(mm_dtype)
    # K / V projections: single matmuls with MXU N = Btile*L.
    k = jnp.dot(wk_ref[...].astype(mm_dtype), xc_mm,
                preferred_element_type=jnp.float32) + bk_ref[...]  # (c, Btile*L)
    v = jnp.dot(wv_ref[...].astype(mm_dtype), xc_mm,
                preferred_element_type=jnp.float32) + bv_ref[...]  # (c, Btile*L)

    # Q only for token 0 -- the only query whose output the module returns.
    xc0 = mean[:, :, 0] + pos[:, 0:1]                              # (c, Btile)
    q0 = jnp.dot(wq_ref[...].astype(mm_dtype), xc0.astype(mm_dtype),
                 preferred_element_type=jnp.float32) + bq_ref[...] # (c, Btile)

    scale = 1.0 / math.sqrt(math.sqrt(ch))
    q0 = q0 * scale
    k = k * scale

    k3 = k.reshape(c, btile, seq_len)                              # (c, Btile, L)
    v3 = v.reshape(c, btile, seq_len)

    # scores[h, b, t] = sum over head-h channels of q0[:, b] * k[:, b, t]
    qk = q0[:, :, None] * k3                                       # (c, Btile, L)
    scores = qk.reshape(num_heads, ch, btile, seq_len).sum(axis=1) # (H, Btile, L)

    # softmax over L in f32
    m = jnp.max(scores, axis=-1, keepdims=True)
    p = jnp.exp(scores - m)
    denom = jnp.sum(p, axis=-1, keepdims=True)
    # NOTE: on hardware `p * pl.reciprocal(denom, approx=True)` would move this
    # onto the otherwise-idle EUP; plain divide kept for exact-f32 validation.
    w = p / denom                                                  # (H, Btile, L)

    # Context for all heads at once: ctx[h*ch+c', b] = sum_t w[h,b,t] * v[h*ch+c', b, t]
    w_full = jnp.broadcast_to(
        w[:, None, :, :], (num_heads, ch, btile, seq_len)).reshape(c, btile, seq_len)
    ctx = jnp.sum(v3 * w_full, axis=-1)                            # (c, Btile)

    # Single fused output projection (full K = c), token 0 only.
    out = jnp.dot(wc_ref[...].astype(mm_dtype), ctx.astype(mm_dtype),
                  preferred_element_type=jnp.float32) + bc_ref[...]  # (out, Btile)

    # Lane-dense write-out: (Btile, 1, out_dim)
    o_ref[...] = jnp.transpose(out, (1, 0))[:, None, :].astype(o_ref.dtype)


def _pick_batch_tile(b, max_tile=8):
    """Largest divisor of b that is <= max_tile while keeping >= 2 grid steps
    (so both TensorCores on megacore / v7x chips get work)."""
    if b <= 1:
        return 1
    best = 1
    limit = min(max_tile, b // 2)
    for t in range(1, limit + 1):
        if b % t == 0:
            best = t
    return best


def attention_pool_2d(x, pos_emb, w_qkv, b_qkv, w_c, b_c, *,
                      num_heads, batch_tile=None, matmul_dtype=jnp.float32):
    """x: (b, c, h, w) NCHW float32. Returns (b, out_dim) == module forward()."""
    b, c, h, w = x.shape
    hw = h * w
    seq_len = hw + 1
    out_dim = w_c.shape[0]
    ch = c // num_heads
    assert c % num_heads == 0
    assert pos_emb.shape == (c, seq_len)
    assert w_qkv.shape == (3 * c, c) and b_qkv.shape == (3 * c, 1)
    assert w_c.shape == (out_dim, c) and b_c.shape == (out_dim, 1)

    if batch_tile is None:
        batch_tile = _pick_batch_tile(b)
    assert b % batch_tile == 0
    num_tiles = b // batch_tile

    # Split the interleaved qkv conv weight (per-head [q|k|v] row blocks) into
    # separate Wq/Wk/Wv with head-major channel order (row j = head*ch + c').
    w_r = w_qkv.reshape(num_heads, 3, ch, c)
    b_r = b_qkv.reshape(num_heads, 3, ch, 1)
    w_q = w_r[:, 0].reshape(c, c)
    w_k = w_r[:, 1].reshape(c, c)
    w_v = w_r[:, 2].reshape(c, c)
    b_q = b_r[:, 0].reshape(c, 1)
    b_k = b_r[:, 1].reshape(c, 1)
    b_v = b_r[:, 2].reshape(c, 1)

    x_flat = x.reshape(b, c, hw)

    kernel = functools.partial(
        _attention_pool_kernel,
        num_heads=num_heads, ch=ch, seq_len=seq_len,
        btile=batch_tile, mm_dtype=matmul_dtype)

    out3 = pl.pallas_call(
        kernel,
        out_shape=jax.ShapeDtypeStruct((b, 1, out_dim), jnp.float32),
        grid=(num_tiles,),
        in_specs=[
            pl.BlockSpec((batch_tile, c, hw), lambda i: (i, 0, 0)),   # x tile
            pl.BlockSpec((c, seq_len), lambda i: (0, 0)),             # pos emb
            pl.BlockSpec((c, c), lambda i: (0, 0)),                   # Wq
            pl.BlockSpec((c, c), lambda i: (0, 0)),                   # Wk
            pl.BlockSpec((c, c), lambda i: (0, 0)),                   # Wv
            pl.BlockSpec((c, 1), lambda i: (0, 0)),                   # bq
            pl.BlockSpec((c, 1), lambda i: (0, 0)),                   # bk
            pl.BlockSpec((c, 1), lambda i: (0, 0)),                   # bv
            pl.BlockSpec((out_dim, c), lambda i: (0, 0)),             # Wc
            pl.BlockSpec((out_dim, 1), lambda i: (0, 0)),             # bc
        ],
        out_specs=pl.BlockSpec((batch_tile, 1, out_dim), lambda i: (i, 0, 0)),
        compiler_params=pltpu.CompilerParams(
            dimension_semantics=("parallel",),
            vmem_limit_bytes=48 * 1024 * 1024),
    )(x_flat, pos_emb, w_q, w_k, w_v, b_q, b_k, b_v, w_c, b_c)

    return out3[:, 0, :]


def attention_pool_2d_reference(x, pos_emb, w_qkv, b_qkv, w_c, b_c, *, num_heads):
    """Pure-JAX reference mirroring the PyTorch forward exactly."""
    b, c, h, w = x.shape
    xf = x.reshape(b, c, -1)
    xf = jnp.concatenate([xf.mean(axis=-1, keepdims=True), xf], axis=-1)
    xf = xf + pos_emb[None, :, :]
    qkv = jnp.einsum('oc,bcl->bol', w_qkv, xf) + b_qkv[None]          # (b, 3c, L)

    bs, width, length = qkv.shape
    ch = width // (3 * num_heads)
    qkv_r = qkv.reshape(bs * num_heads, ch * 3, length)
    q, k, v = qkv_r[:, :ch], qkv_r[:, ch:2 * ch], qkv_r[:, 2 * ch:]
    scale = 1.0 / math.sqrt(math.sqrt(ch))
    weight = jnp.einsum('bct,bcs->bts', q * scale, k * scale)
    weight = jax.nn.softmax(weight.astype(jnp.float32), axis=-1)
    a = jnp.einsum('bts,bcs->bct', weight, v)
    a = a.reshape(bs, -1, length)                                     # (b, c, L)
    out = jnp.einsum('oc,bcl->bol', w_c, a) + b_c[None]
    return out[:, :, 0]


if __name__ == "__main__":
    # Small config: spacial_dim=4, embed_dim=16, n_heads_channels=8 -> 2 heads.
    batch = 4
    spacial_dim = 4
    embed_dim = 16
    n_heads_channels = 8
    output_dim = 24
    num_heads = embed_dim // n_heads_channels
    seq_len = spacial_dim ** 2 + 1

    key = jax.random.PRNGKey(0)
    k_pos, k_wq, k_bq, k_wc, k_bc, k_x = jax.random.split(key, 6)

    pos_emb = jax.random.normal(k_pos, (embed_dim, seq_len), jnp.float32) / (embed_dim ** 0.5)
    w_qkv = jax.random.normal(k_wq, (3 * embed_dim, embed_dim), jnp.float32) * 0.05
    b_qkv = jax.random.normal(k_bq, (3 * embed_dim, 1), jnp.float32) * 0.05
    w_c = jax.random.normal(k_wc, (output_dim, embed_dim), jnp.float32) * 0.05
    b_c = jax.random.normal(k_bc, (output_dim, 1), jnp.float32) * 0.05

    x = jax.random.normal(k_x, (batch, embed_dim, spacial_dim, spacial_dim), jnp.float32)

    out = attention_pool_2d(x, pos_emb, w_qkv, b_qkv, w_c, b_c, num_heads=num_heads)
    out = jax.block_until_ready(out)

    ref = attention_pool_2d_reference(x, pos_emb, w_qkv, b_qkv, w_c, b_c, num_heads=num_heads)
    ref = jax.block_until_ready(ref)

    assert out.shape == (batch, output_dim), out.shape
    max_err = float(jnp.max(jnp.abs(out - ref)))
    assert jnp.allclose(out, ref, rtol=2e-3, atol=2e-3), max_err

    print("KERNEL_OK")
</pallas_src>

<mosaic_0001>
module attributes {stable_mosaic.version = 11 : i64} {
  func.func @_attention_pool_kernel(%arg0: i32, %arg1: memref<2x16x16xf32, #tpu.memory_space<vmem>>, %arg2: memref<16x17xf32, #tpu.memory_space<vmem>>, %arg3: memref<16x16xf32, #tpu.memory_space<vmem>>, %arg4: memref<16x16xf32, #tpu.memory_space<vmem>>, %arg5: memref<16x16xf32, #tpu.memory_space<vmem>>, %arg6: memref<16x1xf32, #tpu.memory_space<vmem>>, %arg7: memref<16x1xf32, #tpu.memory_space<vmem>>, %arg8: memref<16x1xf32, #tpu.memory_space<vmem>>, %arg9: memref<24x16xf32, #tpu.memory_space<vmem>>, %arg10: memref<24x1xf32, #tpu.memory_space<vmem>>, %arg11: memref<2x1x24xf32, #tpu.memory_space<vmem>>) attributes {dimension_semantics = [#tpu.dimension_semantics<parallel>], iteration_bounds = array<i64: 2>, scalar_prefetch = 0 : i64, scratch_operands = 0 : i64, tpu.core_type = #tpu.core_type<tc>, window_params = [{transform_indices = @transform_0, window_bounds = array<i64: 2, 16, 16>}, {pipeline_mode = #tpu.pipeline_mode<synchronous>, transform_indices = @transform_1, window_bounds = array<i64: 16, 17>}, {pipeline_mode = #tpu.pipeline_mode<synchronous>, transform_indices = @transform_2, window_bounds = array<i64: 16, 16>}, {pipeline_mode = #tpu.pipeline_mode<synchronous>, transform_indices = @transform_3, window_bounds = array<i64: 16, 16>}, {pipeline_mode = #tpu.pipeline_mode<synchronous>, transform_indices = @transform_4, window_bounds = array<i64: 16, 16>}, {pipeline_mode = #tpu.pipeline_mode<synchronous>, transform_indices = @transform_5, window_bounds = array<i64: 16, 1>}, {pipeline_mode = #tpu.pipeline_mode<synchronous>, transform_indices = @transform_6, window_bounds = array<i64: 16, 1>}, {pipeline_mode = #tpu.pipeline_mode<synchronous>, transform_indices = @transform_7, window_bounds = array<i64: 16, 1>}, {pipeline_mode = #tpu.pipeline_mode<synchronous>, transform_indices = @transform_8, window_bounds = array<i64: 24, 16>}, {pipeline_mode = #tpu.pipeline_mode<synchronous>, transform_indices = @transform_9, window_bounds = array<i64: 24, 1>}, {transform_indices = @transform_10, window_bounds = array<i64: 2, 1, 24>}]} {
    %c0 = arith.constant 0 : index
    %c0_0 = arith.constant 0 : index
    %c0_1 = arith.constant 0 : index
    %0 = vector.load %arg1[%c0, %c0_0, %c0_1] : memref<2x16x16xf32, #tpu.memory_space<vmem>>, vector<2x16x16xf32>
    %1 = tpu.transpose %0, [1, 0, 2] : vector<2x16x16xf32> -> vector<16x2x16xf32>
    %cst = arith.constant dense<0.000000e+00> : vector<16x2xf32>
    %2 = vector.multi_reduction <add>, %1, %cst [2] : vector<16x2x16xf32> to vector<16x2xf32>
    %3 = vector.shape_cast %2 : vector<16x2xf32> to vector<16x2x1xf32>
    %cst_2 = arith.constant 1.600000e+01 : f32
    %4 = vector.broadcast %cst_2 : f32 to vector<16x2x1xf32>
    %5 = arith.divf %3, %4 : vector<16x2x1xf32>
    %c0_3 = arith.constant 0 : index
    %c0_4 = arith.constant 0 : index
    %6 = vector.load %arg2[%c0_3, %c0_4] : memref<16x17xf32, #tpu.memory_space<vmem>>, vector<16x17xf32>
    %7 = tpu.concatenate %5, %1 in 2 : vector<16x2x1xf32>, vector<16x2x16xf32> -> vector<16x2x17xf32>
    %8 = vector.shape_cast %6 : vector<16x17xf32> to vector<16x1x17xf32>
    %9 = vector.broadcast %8 : vector<16x1x17xf32> to vector<16x2x17xf32>
    %10 = arith.addf %7, %9 : vector<16x2x17xf32>
    %11 = vector.shape_cast %10 : vector<16x2x17xf32> to vector<16x34xf32>
    %c0_5 = arith.constant 0 : index
    %c0_6 = arith.constant 0 : index
    %12 = vector.load %arg4[%c0_5, %c0_6] : memref<16x16xf32, #tpu.memory_space<vmem>>, vector<16x16xf32>
    %cst_7 = arith.constant dense<0.000000e+00> : vector<16x34xf32>
    %13 = tpu.matmul %12, %11, %cst_7 {dimension_numbers = #tpu.dot_dimension_numbers<[1], [0], [0], [1], [0, 0, 1, 1], [], []>} : vector<16x16xf32>, vector<16x34xf32>, vector<16x34xf32> -> vector<16x34xf32>
    %c0_8 = arith.constant 0 : index
    %c0_9 = arith.constant 0 : index
    %14 = vector.load %arg7[%c0_8, %c0_9] : memref<16x1xf32, #tpu.memory_space<vmem>>, vector<16x1xf32>
    %15 = vector.broadcast %14 : vector<16x1xf32> to vector<16x34xf32>
    %16 = arith.addf %13, %15 : vector<16x34xf32>
    %c0_10 = arith.constant 0 : index
    %c0_11 = arith.constant 0 : index
    %17 = vector.load %arg5[%c0_10, %c0_11] : memref<16x16xf32, #tpu.memory_space<vmem>>, vector<16x16xf32>
    %cst_12 = arith.constant dense<0.000000e+00> : vector<16x34xf32>
    %18 = tpu.matmul %17, %11, %cst_12 {dimension_numbers = #tpu.dot_dimension_numbers<[1], [0], [0], [1], [0, 0, 1, 1], [], []>} : vector<16x16xf32>, vector<16x34xf32>, vector<16x34xf32> -> vector<16x34xf32>
    %c0_13 = arith.constant 0 : index
    %c0_14 = arith.constant 0 : index
    %19 = vector.load %arg8[%c0_13, %c0_14] : memref<16x1xf32, #tpu.memory_space<vmem>>, vector<16x1xf32>
    %20 = vector.broadcast %19 : vector<16x1xf32> to vector<16x34xf32>
    %21 = arith.addf %18, %20 : vector<16x34xf32>
    %22 = vector.shape_cast %5 : vector<16x2x1xf32> to vector<16x2xf32>
    %23 = vector.extract_strided_slice %6 {offsets = [0, 0], sizes = [16, 1], strides = [1, 1]} : vector<16x17xf32> to vector<16x1xf32>
    %24 = vector.broadcast %23 : vector<16x1xf32> to vector<16x2xf32>
    %25 = arith.addf %22, %24 : vector<16x2xf32>
    %c0_15 = arith.constant 0 : index
    %c0_16 = arith.constant 0 : index
    %26 = vector.load %arg3[%c0_15, %c0_16] : memref<16x16xf32, #tpu.memory_space<vmem>>, vector<16x16xf32>
    %cst_17 = arith.constant dense<0.000000e+00> : vector<16x2xf32>
    %27 = tpu.matmul %26, %25, %cst_17 {dimension_numbers = #tpu.dot_dimension_numbers<[1], [0], [0], [1], [0, 0, 1, 1], [], []>} : vector<16x16xf32>, vector<16x2xf32>, vector<16x2xf32> -> vector<16x2xf32>
    %c0_18 = arith.constant 0 : index
    %c0_19 = arith.constant 0 : index
    %28 = vector.load %arg6[%c0_18, %c0_19] : memref<16x1xf32, #tpu.memory_space<vmem>>, vector<16x1xf32>
    %29 = vector.broadcast %28 : vector<16x1xf32> to vector<16x2xf32>
    %30 = arith.addf %27, %29 : vector<16x2xf32>
    %cst_20 = arith.constant 0.594603539 : f32
    %31 = vector.broadcast %cst_20 : f32 to vector<16x2xf32>
    %32 = arith.mulf %30, %31 : vector<16x2xf32>
    %cst_21 = arith.constant 0.594603539 : f32
    %33 = vector.broadcast %cst_21 : f32 to vector<16x34xf32>
    %34 = arith.mulf %16, %33 : vector<16x34xf32>
    %35 = vector.shape_cast %34 : vector<16x34xf32> to vector<16x2x17xf32>
    %36 = vector.shape_cast %21 : vector<16x34xf32> to vector<16x2x17xf32>
    %37 = vector.shape_cast %32 : vector<16x2xf32> to vector<16x2x1xf32>
    %38 = vector.broadcast %37 : vector<16x2x1xf32> to vector<16x2x17xf32>
    %39 = arith.mulf %38, %35 : vector<16x2x17xf32>
    %40 = vector.shape_cast %39 : vector<16x2x17xf32> to vector<2x8x2x17xf32>
    %cst_22 = arith.constant dense<0.000000e+00> : vector<2x2x17xf32>
    %41 = vector.multi_reduction <add>, %40, %cst_22 [1] : vector<2x8x2x17xf32> to vector<2x2x17xf32>
    %cst_23 = arith.constant dense<0xFF800000> : vector<2x2xf32>
    %42 = vector.multi_reduction <maximumf>, %41, %cst_23 [2] : vector<2x2x17xf32> to vector<2x2xf32>
    %43 = vector.shape_cast %42 : vector<2x2xf32> to vector<2x2x1xf32>
    %44 = vector.broadcast %43 : vector<2x2x1xf32> to vector<2x2x17xf32>
    %45 = arith.subf %41, %44 : vector<2x2x17xf32>
    %46 = math.exp %45 : vector<2x2x17xf32>
    %cst_24 = arith.constant dense<0.000000e+00> : vector<2x2xf32>
    %47 = vector.multi_reduction <add>, %46, %cst_24 [2] : vector<2x2x17xf32> to vector<2x2xf32>
    %48 = vector.shape_cast %47 : vector<2x2xf32> to vector<2x2x1xf32>
    %49 = vector.broadcast %48 : vector<2x2x1xf32> to vector<2x2x17xf32>
    %50 = arith.divf %46, %49 : vector<2x2x17xf32>
    %51 = vector.shape_cast %50 : vector<2x2x17xf32> to vector<2x1x2x17xf32>
    %52 = vector.shape_cast %51 : vector<2x1x2x17xf32> to vector<2x1x2x17xf32>
    %53 = vector.broadcast %52 : vector<2x1x2x17xf32> to vector<2x8x2x17xf32>
    %54 = vector.shape_cast %53 : vector<2x8x2x17xf32> to vector<16x2x17xf32>
    %55 = arith.mulf %36, %54 : vector<16x2x17xf32>
    %cst_25 = arith.constant dense<0.000000e+00> : vector<16x2xf32>
    %56 = vector.multi_reduction <add>, %55, %cst_25 [2] : vector<16x2x17xf32> to vector<16x2xf32>
    %c0_26 = arith.constant 0 : index
    %c0_27 = arith.constant 0 : index
    %57 = vector.load %arg9[%c0_26, %c0_27] : memref<24x16xf32, #tpu.memory_space<vmem>>, vector<24x16xf32>
    %cst_28 = arith.constant dense<0.000000e+00> : vector<24x2xf32>
    %58 = tpu.matmul %57, %56, %cst_28 {dimension_numbers = #tpu.dot_dimension_numbers<[1], [0], [0], [1], [0, 0, 1, 1], [], []>} : vector<24x16xf32>, vector<16x2xf32>, vector<24x2xf32> -> vector<24x2xf32>
    %c0_29 = arith.constant 0 : index
    %c0_30 = arith.constant 0 : index
    %59 = vector.load %arg10[%c0_29, %c0_30] : memref<24x1xf32, #tpu.memory_space<vmem>>, vector<24x1xf32>
    %60 = vector.broadcast %59 : vector<24x1xf32> to vector<24x2xf32>
    %61 = arith.addf %58, %60 : vector<24x2xf32>
    %62 = tpu.transpose %61, [1, 0] : vector<24x2xf32> -> vector<2x24xf32>
    %63 = vector.shape_cast %62 : vector<2x24xf32> to vector<2x1x24xf32>
    %c0_31 = arith.constant 0 : index
    %c0_32 = arith.constant 0 : index
    %c0_33 = arith.constant 0 : index
    %64 = vector.load %arg11[%c0_31, %c0_32, %c0_33] : memref<2x1x24xf32, #tpu.memory_space<vmem>>, vector<2x1x24xf32>
    tpu.vector_store %arg11[%c0_31, %c0_32, %c0_33], %63 {strides = array<i32>} : memref<2x1x24xf32, #tpu.memory_space<vmem>>, vector<2x1x24xf32>,
    return
  }
  func.func @transform_0(%arg0: i32) -> (i32, i32, i32) {
    %c0_i32 = arith.constant 0 : i32
    %c0_i32_0 = arith.constant 0 : i32
    %c0_i32_1 = arith.constant 0 : i32
    return %arg0, %c0_i32, %c0_i32_0 : i32, i32, i32
  }
  func.func @transform_1(%arg0: i32) -> (i32, i32) {
    %c0_i32 = arith.constant 0 : i32
    %c0_i32_0 = arith.constant 0 : i32
    %c0_i32_1 = arith.constant 0 : i32
    return %c0_i32, %c0_i32_0 : i32, i32
  }
  func.func @transform_2(%arg0: i32) -> (i32, i32) {
    %c0_i32 = arith.constant 0 : i32
    %c0_i32_0 = arith.constant 0 : i32
    %c0_i32_1 = arith.constant 0 : i32
    return %c0_i32, %c0_i32_0 : i32, i32
  }
  func.func @transform_3(%arg0: i32) -> (i32, i32) {
    %c0_i32 = arith.constant 0 : i32
    %c0_i32_0 = arith.constant 0 : i32
    %c0_i32_1 = arith.constant 0 : i32
    return %c0_i32, %c0_i32_0 : i32, i32
  }
  func.func @transform_4(%arg0: i32) -> (i32, i32) {
    %c0_i32 = arith.constant 0 : i32
    %c0_i32_0 = arith.constant 0 : i32
    %c0_i32_1 = arith.constant 0 : i32
    return %c0_i32, %c0_i32_0 : i32, i32
  }
  func.func @transform_5(%arg0: i32) -> (i32, i32) {
    %c0_i32 = arith.constant 0 : i32
    %c0_i32_0 = arith.constant 0 : i32
    %c0_i32_1 = arith.constant 0 : i32
    return %c0_i32, %c0_i32_0 : i32, i32
  }
  func.func @transform_6(%arg0: i32) -> (i32, i32) {
    %c0_i32 = arith.constant 0 : i32
    %c0_i32_0 = arith.constant 0 : i32
    %c0_i32_1 = arith.constant 0 : i32
    return %c0_i32, %c0_i32_0 : i32, i32
  }
  func.func @transform_7(%arg0: i32) -> (i32, i32) {
    %c0_i32 = arith.constant 0 : i32
    %c0_i32_0 = arith.constant 0 : i32
    %c0_i32_1 = arith.constant 0 : i32
    return %c0_i32, %c0_i32_0 : i32, i32
  }
  func.func @transform_8(%arg0: i32) -> (i32, i32) {
    %c0_i32 = arith.constant 0 : i32
    %c0_i32_0 = arith.constant 0 : i32
    %c0_i32_1 = arith.constant 0 : i32
    return %c0_i32, %c0_i32_0 : i32, i32
  }
  func.func @transform_9(%arg0: i32) -> (i32, i32) {
    %c0_i32 = arith.constant 0 : i32
    %c0_i32_0 = arith.constant 0 : i32
    %c0_i32_1 = arith.constant 0 : i32
    return %c0_i32, %c0_i32_0 : i32, i32
  }
  func.func @transform_10(%arg0: i32) -> (i32, i32, i32) {
    %c0_i32 = arith.constant 0 : i32
    %c0_i32_0 = arith.constant 0 : i32
    %c0_i32_1 = arith.constant 0 : i32
    return %arg0, %c0_i32, %c0_i32_0 : i32, i32, i32
  }
}

</mosaic_0001>

<llo_original>
// kernel: tpu_custom_call.1
$region0: #{tpu_custom_call.1}
  #allocation0 [shape = 'u32[]', space=smem, size = 0x4, offset = 0x4, fixed_abs, tag = 'smem constant byte address 0x4 - core index']
  #allocation1 [shape = 'u32[144,128]{1,0:T(1,128)}', space=vmem, size = 0x12000, scoped, tag = 'internal scratch']
  %s0 = inlined_call_operand.vmem [shape: f32[4,16,16], index: 0, kind: input, shape index: {}]
  %s1 = inlined_call_operand.vmem [shape: f32[16,17], index: 1, kind: input, shape index: {}]
  %s2 = inlined_call_operand.vmem [shape: f32[16,16], index: 2, kind: input, shape index: {}]
  %s3 = inlined_call_operand.vmem [shape: f32[16,16], index: 3, kind: input, shape index: {}]
  %s4 = inlined_call_operand.hbm [shape: f32[16,16], index: 4, kind: input, shape index: {}]
  %s5 = inlined_call_operand.vmem [shape: f32[16,1], index: 5, kind: input, shape index: {}]
  %s6 = inlined_call_operand.vmem [shape: f32[16,1], index: 6, kind: input, shape index: {}]
  %s7 = inlined_call_operand.vmem [shape: f32[16,1], index: 7, kind: input, shape index: {}]
  %s8 = inlined_call_operand.vmem [shape: f32[24,16], index: 8, kind: input, shape index: {}]
  %s9 = inlined_call_operand.vmem [shape: f32[24,1], index: 9, kind: input, shape index: {}]
  %s10 = inlined_call_operand.hbm [shape: f32[4,1,24], index: 10, kind: output, shape index: {}]
  %s11 = sld [smem:[#allocation0]]
  $region77: #{tpu_custom_call.1} parent=0
    _
  %s13 = ssub.s32 1, %s11
  %s14 = scalar_select 0, %s13, %s11
  $region1: #{tpu_custom_call.1} parent=0
    #allocation2 [shape = 'u8[8192]{0}', space=vmem, size = 0x2000, scoped, tag = 'input window, operand 4, single buffered']
    #allocation3 [shape = 's32[2]{0}', space=sflag, size = 0x8, scoped, tag = 'scoped memory for tpu_custom_call.1']
    #allocation4 [shape = 's32[2]{0}', space=sflag, size = 0x8, scoped, tag = 'scoped memory for tpu_custom_call.1']
    #allocation5 [shape = 'u8[2048]{0}', space=vmem, size = 0x800, scoped, tag = 'output window, operand 0']
    %15 = vsyncpa [#allocation3], 0
    %16 = vsyncpa [#allocation4], 0
    %s17 = scalar_lea.sflag [#allocation4], 1
    %18 = vsyncpa %s17, 0
    loop: start=0, step=1, limit=4
    $region2: #{tpu_custom_call.1} parent=1 // loop_pre_header
      _
    $region3: #{tpu_custom_call.1} parent=1 // loop_header
      %s20 = sphi 0, %s24
      %p21 = scmp.ge.s32.totalorder %s20, 4
      %s30 = sphi 0, %s32
      %s33 = sphi 0, %s30
      %s34 = sphi 0, %s33
      %s50 = sphi 0, %s34
      %s54 = sphi 0, %s54
      %s56 = sphi 0, %s54
      %s57 = sphi 0, %s56
      %s71 = sphi 0, %s57
      %s75 = sphi 0, %s75
      %s77 = sphi 0, %s75
      %s78 = sphi 0, %s77
      %s92 = sphi 0, %s78
      %s96 = sphi 0, %s96
      %s98 = sphi 0, %s96
      %s99 = sphi 0, %s98
      %s113 = sphi 0, %s99
      %s117 = sphi 0, %s117
      %s119 = sphi 0, %s117
      %s120 = sphi 0, %s119
      %s134 = sphi 0, %s120
      %s138 = sphi 0, %s138
      %s140 = sphi 0, %s138
      %s141 = sphi 0, %s140
      %s155 = sphi 0, %s141
      %s159 = sphi 0, %s159
      %s161 = sphi 0, %s159
      %s162 = sphi 0, %s161
      %s176 = sphi 0, %s162
      %s180 = sphi 0, %s180
      %s182 = sphi 0, %s180
      %s183 = sphi 0, %s182
      %s197 = sphi 0, %s183
      %s201 = sphi 0, %s201
      %s203 = sphi 0, %s201
      %s204 = sphi 0, %s203
      %s218 = sphi 0, %s204
      %s222 = sphi 0, %s222
      %s224 = sphi 0, %s222
      %s225 = sphi 0, %s224
      %s239 = sphi 0, %s225
      %s245 = sphi 0, %s247
      %s248 = sphi 0, %s245
      %s249 = sphi 0, %s248
      %s265 = sphi 0, %s249
    $region4: #{tpu_custom_call.1} parent=1 // loop_header_branch
      %23 = sbr.rel (%p21) target = $region8
    $region5: #{tpu_custom_call.1} parent=1 // loop_body
      %s25 = ssub.s32 %s20, 1
      %s26 = ssub.s32 %s20, 2
      %s27 = sadd.s32 %s20, 1
      %s28 = ssub.s32 %s20, %s27
      %p29 = scmp.eq.s32.totalorder %s28, 0
      %s31 = sadd.s32 %s30, 1
      %s32 = scalar_select %p29, %s30, %s31
      %p35 = pneg %p29
      %p36 = scmp.eq.s32.totalorder %s20, 1
      %p37 = por %p35, %p36
      %p38 = scmp.ne.s32.totalorder %s30, %s33
      %p39 = scmp.eq.s32.totalorder %s20, 0
      %p40 = por %p38, %p39
      %p41 = scmp.ne.s32.totalorder %s30, %s33
      %p42 = scmp.eq.s32.totalorder %s25, 1
      %p43 = por %p41, %p42
      %p44 = scmp.ne.s32.totalorder %s33, %s34
      %p45 = scmp.eq.s32.totalorder %s25, 0
      %p46 = por %p44, %p45
      %p47 = scmp.ne.s32.totalorder %s33, %s34
      %p48 = scmp.eq.s32.totalorder %s26, 1
      %p49 = por %p47, %p48
      %p51 = scmp.ne.s32.totalorder %s34, %s50
      %p52 = scmp.eq.s32.totalorder %s26, 0
      %p53 = por %p51, %p52
      %s55 = sadd.s32 %s54, 1
      %p58 = scmp.eq.s32.totalorder %s20, 1
      %p59 = scmp.ne.s32.totalorder %s54, %s56
      %p60 = scmp.eq.s32.totalorder %s20, 0
      %p61 = por %p59, %p60
      %p62 = scmp.ne.s32.totalorder %s54, %s56
      %p63 = scmp.eq.s32.totalorder %s25, 1
      %p64 = por %p62, %p63
      %p65 = scmp.ne.s32.totalorder %s56, %s57
      %p66 = scmp.eq.s32.totalorder %s25, 0
      %p67 = por %p65, %p66
      %p68 = scmp.ne.s32.totalorder %s56, %s57
      %p69 = scmp.eq.s32.totalorder %s26, 1
      %p70 = por %p68, %p69
      %p72 = scmp.ne.s32.totalorder %s57, %s71
      %p73 = scmp.eq.s32.totalorder %s26, 0
      %p74 = por %p72, %p73
      %s76 = sadd.s32 %s75, 1
      %p79 = scmp.eq.s32.totalorder %s20, 1
      %p80 = scmp.ne.s32.totalorder %s75, %s77
      %p81 = scmp.eq.s32.totalorder %s20, 0
      %p82 = por %p80, %p81
      %p83 = scmp.ne.s32.totalorder %s75, %s77
      %p84 = scmp.eq.s32.totalorder %s25, 1
      %p85 = por %p83, %p84
      %p86 = scmp.ne.s32.totalorder %s77, %s78
      %p87 = scmp.eq.s32.totalorder %s25, 0
      %p88 = por %p86, %p87
      %p89 = scmp.ne.s32.totalorder %s77, %s78
      %p90 = scmp.eq.s32.totalorder %s26, 1
      %p91 = por %p89, %p90
      %p93 = scmp.ne.s32.totalorder %s78, %s92
      %p94 = scmp.eq.s32.totalorder %s26, 0
      %p95 = por %p93, %p94
      %s97 = sadd.s32 %s96, 1
      %p100 = scmp.eq.s32.totalorder %s20, 1
      %p101 = scmp.ne.s32.totalorder %s96, %s98
      %p102 = scmp.eq.s32.totalorder %s20, 0
      %p103 = por %p101, %p102
      %p104 = scmp.ne.s32.totalorder %s96, %s98
      %p105 = scmp.eq.s32.totalorder %s25, 1
      %p106 = por %p104, %p105
      %p107 = scmp.ne.s32.totalorder %s98, %s99
      %p108 = scmp.eq.s32.totalorder %s25, 0
      %p109 = por %p107, %p108
      %p110 = scmp.ne.s32.totalorder %s98, %s99
      %p111 = scmp.eq.s32.totalorder %s26, 1
      %p112 = por %p110, %p111
      %p114 = scmp.ne.s32.totalorder %s99, %s113
      %p115 = scmp.eq.s32.totalorder %s26, 0
      %p116 = por %p114, %p115
      %s118 = sadd.s32 %s117, 1
      %p121 = scmp.eq.s32.totalorder %s20, 1
      %p122 = scmp.ne.s32.totalorder %s117, %s119
      %p123 = scmp.eq.s32.totalorder %s20, 0
      %p124 = por %p122, %p123
      %p125 = scmp.ne.s32.totalorder %s117, %s119
      %p126 = scmp.eq.s32.totalorder %s25, 1
      %p127 = por %p125, %p126
      %p128 = scmp.ne.s32.totalorder %s119, %s120
      %p129 = scmp.eq.s32.totalorder %s25, 0
      %p130 = por %p128, %p129
      %p131 = scmp.ne.s32.totalorder %s119, %s120
      %p132 = scmp.eq.s32.totalorder %s26, 1
      %p133 = por %p131, %p132
      %p135 = scmp.ne.s32.totalorder %s120, %s134
      %p136 = scmp.eq.s32.totalorder %s26, 0
      %p137 = por %p135, %p136
      %s139 = sadd.s32 %s138, 1
      %p142 = scmp.eq.s32.totalorder %s20, 1
      %p143 = scmp.ne.s32.totalorder %s138, %s140
      %p144 = scmp.eq.s32.totalorder %s20, 0
      %p145 = por %p143, %p144
      %p146 = scmp.ne.s32.totalorder %s138, %s140
      %p147 = scmp.eq.s32.totalorder %s25, 1
      %p148 = por %p146, %p147
      %p149 = scmp.ne.s32.totalorder %s140, %s141
      %p150 = scmp.eq.s32.totalorder %s25, 0
      %p151 = por %p149, %p150
      %p152 = scmp.ne.s32.totalorder %s140, %s141
      %p153 = scmp.eq.s32.totalorder %s26, 1
      %p154 = por %p152, %p153
      %p156 = scmp.ne.s32.totalorder %s141, %s155
      %p157 = scmp.eq.s32.totalorder %s26, 0
      %p158 = por %p156, %p157
      %s160 = sadd.s32 %s159, 1
      %p163 = scmp.eq.s32.totalorder %s20, 1
      %p164 = scmp.ne.s32.totalorder %s159, %s161
      %p165 = scmp.eq.s32.totalorder %s20, 0
      %p166 = por %p164, %p165
      %p167 = scmp.ne.s32.totalorder %s159, %s161
      %p168 = scmp.eq.s32.totalorder %s25, 1
      %p169 = por %p167, %p168
      %p170 = scmp.ne.s32.totalorder %s161, %s162
      %p171 = scmp.eq.s32.totalorder %s25, 0
      %p172 = por %p170, %p171
      %p173 = scmp.ne.s32.totalorder %s161, %s162
      %p174 = scmp.eq.s32.totalorder %s26, 1
      %p175 = por %p173, %p174
      %p177 = scmp.ne.s32.totalorder %s162, %s176
      %p178 = scmp.eq.s32.totalorder %s26, 0
      %p179 = por %p177, %p178
      %s181 = sadd.s32 %s180, 1
      %p184 = scmp.eq.s32.totalorder %s20, 1
      %p185 = scmp.ne.s32.totalorder %s180, %s182
      %p186 = scmp.eq.s32.totalorder %s20, 0
      %p187 = por %p185, %p186
      %p188 = scmp.ne.s32.totalorder %s180, %s182
      %p189 = scmp.eq.s32.totalorder %s25, 1
      %p190 = por %p188, %p189
      %p191 = scmp.ne.s32.totalorder %s182, %s183
      %p192 = scmp.eq.s32.totalorder %s25, 0
      %p193 = por %p191, %p192
      %p194 = scmp.ne.s32.totalorder %s182, %s183
      %p195 = scmp.eq.s32.totalorder %s26, 1
      %p196 = por %p194, %p195
      %p198 = scmp.ne.s32.totalorder %s183, %s197
      %p199 = scmp.eq.s32.totalorder %s26, 0
      %p200 = por %p198, %p199
      %s202 = sadd.s32 %s201, 1
      %p205 = scmp.eq.s32.totalorder %s20, 1
      %p206 = scmp.ne.s32.totalorder %s201, %s203
      %p207 = scmp.eq.s32.totalorder %s20, 0
      %p208 = por %p206, %p207
      %p209 = scmp.ne.s32.totalorder %s201, %s203
      %p210 = scmp.eq.s32.totalorder %s25, 1
      %p211 = por %p209, %p210
      %p212 = scmp.ne.s32.totalorder %s203, %s204
      %p213 = scmp.eq.s32.totalorder %s25, 0
      %p214 = por %p212, %p213
      %p215 = scmp.ne.s32.totalorder %s203, %s204
      %p216 = scmp.eq.s32.totalorder %s26, 1
      %p217 = por %p215, %p216
      %p219 = scmp.ne.s32.totalorder %s204, %s218
      %p220 = scmp.eq.s32.totalorder %s26, 0
      %p221 = por %p219, %p220
      %s223 = sadd.s32 %s222, 1
      %p226 = scmp.eq.s32.totalorder %s20, 1
      %p227 = scmp.ne.s32.totalorder %s222, %s224
      %p228 = scmp.eq.s32.totalorder %s20, 0
      %p229 = por %p227, %p228
      %p230 = scmp.ne.s32.totalorder %s222, %s224
      %p231 = scmp.eq.s32.totalorder %s25, 1
      %p232 = por %p230, %p231
      %p233 = scmp.ne.s32.totalorder %s224, %s225
      %p234 = scmp.eq.s32.totalorder %s25, 0
      %p235 = por %p233, %p234
      %p236 = scmp.ne.s32.totalorder %s224, %s225
      %p237 = scmp.eq.s32.totalorder %s26, 1
      %p238 = por %p236, %p237
      %p240 = scmp.ne.s32.totalorder %s225, %s239
      %p241 = scmp.eq.s32.totalorder %s26, 0
      %p242 = por %p240, %p241
      %s243 = ssub.s32 %s20, %s27
      %p244 = scmp.eq.s32.totalorder %s243, 0
      %s246 = sadd.s32 %s245, 1
      %s247 = scalar_select %p244, %s245, %s246
      %p250 = pneg %p244
      %p251 = scmp.eq.s32.totalorder %s20, 1
      %p252 = por %p250, %p251
      %p253 = scmp.ne.s32.totalorder %s245, %s248
      %p254 = scmp.eq.s32.totalorder %s20, 0
      %p255 = por %p253, %p254
      %p256 = scmp.ne.s32.totalorder %s245, %s248
      %p257 = scmp.eq.s32.totalorder %s25, 1
      %p258 = por %p256, %p257
      %p259 = scmp.ne.s32.totalorder %s248, %s249
      %p260 = scmp.eq.s32.totalorder %s25, 0
      %p261 = por %p259, %p260
      %p262 = scmp.ne.s32.totalorder %s248, %s249
      %p263 = scmp.eq.s32.totalorder %s26, 1
      %p264 = por %p262, %p263
      %p266 = scmp.ne.s32.totalorder %s249, %s265
      %p267 = scmp.eq.s32.totalorder %s26, 0
      %p268 = por %p266, %p267
      %p269 = scmp.le.s32.totalorder 1, %s20
      %p270 = scmp.lt.s32.totalorder %s20, 3
      %p271 = pnand %p269, %p270
      %p272 = pneg %p271
      // Predicated region
      $region9: #{tpu_custom_call.1} parent=5 // pred_check
        _
      $region10: #{tpu_custom_call.1} parent=5 // pred_check_branch
        %274 = sbr.rel (%p271) target = $region12
      $region11: #{tpu_custom_call.1} parent=5 // pred_region
        %s275 = ssub.s32 %s20, 1
        // Predicated region
        $region13: #{tpu_custom_call.1} parent=11 // pred_check
          %p276 = pneg %p67
        $region14: #{tpu_custom_call.1} parent=11 // pred_check_branch
          %278 = sbr.rel (%p276) target = $region16
        $region15: #{tpu_custom_call.1} parent=11 // pred_region
          _
        $region16: #{tpu_custom_call.1} parent=11 // pred_fallthru
          _
        // Predicated region
        $region17: #{tpu_custom_call.1} parent=11 // pred_check
          %p279 = pneg %p88
        $region18: #{tpu_custom_call.1} parent=11 // pred_check_branch
          %281 = sbr.rel (%p279) target = $region20
        $region19: #{tpu_custom_call.1} parent=11 // pred_region
          _
        $region20: #{tpu_custom_call.1} parent=11 // pred_fallthru
          _
        // Predicated region
        $region21: #{tpu_custom_call.1} parent=11 // pred_check
          %p282 = pneg %p109
        $region22: #{tpu_custom_call.1} parent=11 // pred_check_branch
          %284 = sbr.rel (%p282) target = $region24
        $region23: #{tpu_custom_call.1} parent=11 // pred_region
          _
        $region24: #{tpu_custom_call.1} parent=11 // pred_fallthru
          _
        // Predicated region
        $region25: #{tpu_custom_call.1} parent=11 // pred_check
          %p285 = pneg %p130
        $region26: #{tpu_custom_call.1} parent=11 // pred_check_branch
          %287 = sbr.rel (%p285) target = $region28
        $region27: #{tpu_custom_call.1} parent=11 // pred_region
          %s289 = ssub.s32 256, 256
          %290 = vsyncadd [#allocation3], %s289
          %s291 = sshll.u32 [#allocation2], 4
          %s292 = int_to_ptr.vmem [resolvable:$true] %s291
          %297 = dma.hbm_to_vmem [thread:$0]  %s4, 256, %s292, [#allocation3], 128, 128, 8
        $region28: #{tpu_custom_call.1} parent=11 // pred_fallthru
          _
        // Predicated region
        $region29: #{tpu_custom_call.1} parent=11 // pred_check
          %p298 = pneg %p151
        $region30: #{tpu_custom_call.1} parent=11 // pred_check_branch
          %300 = sbr.rel (%p298) target = $region32
        $region31: #{tpu_custom_call.1} parent=11 // pred_region
          _
        $region32: #{tpu_custom_call.1} parent=11 // pred_fallthru
          _
        // Predicated region
        $region33: #{tpu_custom_call.1} parent=11 // pred_check
          %p301 = pneg %p172
        $region34: #{tpu_custom_call.1} parent=11 // pred_check_branch
          %303 = sbr.rel (%p301) target = $region36
        $region35: #{tpu_custom_call.1} parent=11 // pred_region
          _
        $region36: #{tpu_custom_call.1} parent=11 // pred_fallthru
          _
        // Predicated region
        $region37: #{tpu_custom_call.1} parent=11 // pred_check
          %p304 = pneg %p193
        $region38: #{tpu_custom_call.1} parent=11 // pred_check_branch
          %306 = sbr.rel (%p304) target = $region40
        $region39: #{tpu_custom_call.1} parent=11 // pred_region
          _
        $region40: #{tpu_custom_call.1} parent=11 // pred_fallthru
          _
        // Predicated region
        $region41: #{tpu_custom_call.1} parent=11 // pred_check
          %p307 = pneg %p214
        $region42: #{tpu_custom_call.1} parent=11 // pred_check_branch
          %309 = sbr.rel (%p307) target = $region44
        $region43: #{tpu_custom_call.1} parent=11 // pred_region
          _
        $region44: #{tpu_custom_call.1} parent=11 // pred_fallthru
          _
        // Predicated region
        $region45: #{tpu_custom_call.1} parent=11 // pred_check
          %p310 = pneg %p235
        $region46: #{tpu_custom_call.1} parent=11 // pred_check_branch
          %312 = sbr.rel (%p310) target = $region48
        $region47: #{tpu_custom_call.1} parent=11 // pred_region
          _
        $region48: #{tpu_custom_call.1} parent=11 // pred_fallthru
          _
      $region12: #{tpu_custom_call.1} parent=5 // pred_fallthru
        _
      %p313 = scmp.lt.s32.totalorder %s20, 2
      // Predicated region
      $region49: #{tpu_custom_call.1} parent=5 // pred_check
        %p314 = pneg %p313
      $region50: #{tpu_custom_call.1} parent=5 // pred_check_branch
        %316 = sbr.rel (%p314) target = $region52
      $region51: #{tpu_custom_call.1} parent=5 // pred_region
        // Predicated region
        $region53: #{tpu_custom_call.1} parent=51 // pred_check
          %p317 = pneg %p40
        $region54: #{tpu_custom_call.1} parent=51 // pred_check_branch
          %319 = sbr.rel (%p317) target = $region56
        $region55: #{tpu_custom_call.1} parent=51 // pred_region
          %s320 = smul.u32 2, %s20
          %p321 = scmp.lt.s32.totalorder %s320, 3
          %s322 = scalar_select %p321, %s320, 3
          %s323 = smul.addr %s322, 2
          %s324 = smul.addr %s323, 8
          %s325 = scalar_lea.vmem %s0, %s324
          %s326 = smul.u32 2, %s20
        $region56: #{tpu_custom_call.1} parent=51 // pred_fallthru
          _
      $region52: #{tpu_custom_call.1} parent=5 // pred_fallthru
        _
      %p327 = scmp.le.s32.totalorder 1, %s20
      %p328 = scmp.lt.s32.totalorder %s20, 3
      %p329 = pnand %p327, %p328
      %p330 = pneg %p329
      // Predicated region
      $region57: #{tpu_custom_call.1} parent=5 // pred_check
        _
      $region58: #{tpu_custom_call.1} parent=5 // pred_check_branch
        %332 = sbr.rel (%p329) target = $region60
      $region59: #{tpu_custom_call.1} parent=5 // pred_region
        %s333 = ssub.s32 %s20, 1
        // Predicated region
        $region61: #{tpu_custom_call.1} parent=59 // pred_check
          %p334 = pneg %p130
        $region62: #{tpu_custom_call.1} parent=59 // pred_check_branch
          %336 = sbr.rel (%p334) target = $region64
        $region63: #{tpu_custom_call.1} parent=59 // pred_region
          %337 = dma.done [#allocation3], 256
        $region64: #{tpu_custom_call.1} parent=59 // pred_fallthru
          _
        %s338 = smul.u32 2, %s25
        %p339 = scmp.lt.s32.totalorder %s338, 3
        %s340 = scalar_select %p339, %s338, 3
        %s341 = smul.addr %s340, 2
        %s342 = smul.addr %s341, 8
        %s343 = scalar_lea.vmem %s0, %s342
        %p344 = pneg %p46
        %p345 = pneg %p43
        %p346 = pneg %p67
        %p347 = pneg %p64
        %p348 = pneg %p88
        %p349 = pneg %p85
        %p350 = pneg %p109
        %p351 = pneg %p106
        %p352 = pneg %p130
        %p353 = pneg %p127
        %p354 = pneg %p151
        %p355 = pneg %p148
        %p356 = pneg %p172
        %p357 = pneg %p169
        %p358 = pneg %p193
        %p359 = pneg %p190
        %p360 = pneg %p214
        %p361 = pneg %p211
        %p362 = pneg %p235
        %p363 = pneg %p232
        %p364 = pneg %p261
        %p365 = pneg %p258
        %s366 = sand.u32 %s248, 1
        %s367 = scalar_lea.sflag [#allocation4], %s366
        %s368 = sand.u32 %s248, 1
        %s369 = smul.addr %s368, 2
        %s370 = scalar_lea.vmem [#allocation5], %s369
        %s371 = smul.u32 2, %s25
        %p372 = scmp.lt.s32.totalorder %s371, 3
        %s373 = scalar_select %p372, %s371, 3
        %s374 = smul.addr %s373, 2
        %s375 = smul.addr %s374, 8
        %s376 = scalar_lea.vmem %s0, %s375
        %s377 = smul.u32 2, %s25
        %s378 = smul.u32 2, %s25
        %v379 = vld [vmem:[%s376] sm:$0xff]
        %v380 = vld [vmem:[%s376 + $0x8] sm:$0xff]
        %v381 = vld [vmem:[%s376 + $0x10] sm:$0xff]
        %v382 = vld [vmem:[%s376 + $0x18] sm:$0xff]
        %v383 = vcombine.high %v379, 0.0
        %v385 = vunpack.c.l.s4 1983009808
        %v386 = vunpack.c.0.s8 %v385
        %v387 = vlaneseq
        %v388 = vshrl.u32 %v387, 7
        %v389 = vsub.s32 %v386, %v388
        %v390 = vrot.slane %v379, %v389
        %v392 = vunpack.c.l.s4 1983009808
        %v393 = vunpack.c.0.s8 %v392
        %v394 = vlaneseq
        %v395 = vshrl.u32 %v394, 7
        %v396 = vsub.s32 %v393, %v395
        %v397 = vrot.slane %v383, %v396
        %v398 = vcombine.high %v381, 0.0
        %v400 = vunpack.c.l.s4 1983009808
        %v401 = vunpack.c.0.s8 %v400
        %v402 = vlaneseq
        %v403 = vshrl.u32 %v402, 7
        %v404 = vsub.s32 %v401, %v403
        %v405 = vrot.slane %v381, %v404
        %v407 = vunpack.c.l.s4 1983009808
        %v408 = vunpack.c.0.s8 %v407
        %v409 = vlaneseq
        %v410 = vshrl.u32 %v409, 7
        %v411 = vsub.s32 %v408, %v410
        %v412 = vrot.slane %v398, %v411
        %v413 = vcombine.low %v390, %v405
        %v414 = vcombine.high %v390, %v405
        %v416 = vunpack.c.l.s4 1934713408
        %v417 = vunpack.c.0.s8 %v416
        %v418 = vlaneseq
        %v419 = vshrl.u32 %v418, 7
        %v420 = vsub.s32 %v417, %v419
        %v421 = vrot.slane %v413, %v420
        %v423 = vunpack.c.l.s4 1934713408
        %v424 = vunpack.c.0.s8 %v423
        %v425 = vlaneseq
        %v426 = vshrl.u32 %v425, 7
        %v427 = vsub.s32 %v424, %v426
        %v428 = vrot.slane %v414, %v427
        %v429 = vcombine.low %v397, %v412
        %v430 = vcombine.high %v397, %v412
        %v432 = vunpack.c.l.s4 1934713408
        %v433 = vunpack.c.0.s8 %v432
        %v434 = vlaneseq
        %v435 = vshrl.u32 %v434, 7
        %v436 = vsub.s32 %v433, %v435
        %v437 = vrot.slane %v429, %v436
        %v439 = vunpack.c.l.s4 1934713408
        %v440 = vunpack.c.0.s8 %v439
        %v441 = vlaneseq
        %v442 = vshrl.u32 %v441, 7
        %v443 = vsub.s32 %v440, %v442
        %v444 = vrot.slane %v430, %v443
        %v445 = vcombine.high %v421, 0.0
        %v446 = vcombine.high %v428, 0.0
        %v447 = vcombine.high %v437, 0.0
        %v448 = vcombine.high %v444, 0.0
        %v449 = vcombine.high %v380, 0.0
        %v451 = vunpack.c.l.s4 1983009808
        %v452 = vunpack.c.0.s8 %v451
        %v453 = vlaneseq
        %v454 = vshrl.u32 %v453, 7
        %v455 = vsub.s32 %v452, %v454
        %v456 = vrot.slane %v380, %v455
        %v458 = vunpack.c.l.s4 1983009808
        %v459 = vunpack.c.0.s8 %v458
        %v460 = vlaneseq
        %v461 = vshrl.u32 %v460, 7
        %v462 = vsub.s32 %v459, %v461
        %v463 = vrot.slane %v449, %v462
        %v464 = vcombine.high %v382, 0.0
        %v466 = vunpack.c.l.s4 1983009808
        %v467 = vunpack.c.0.s8 %v466
        %v468 = vlaneseq
        %v469 = vshrl.u32 %v468, 7
        %v470 = vsub.s32 %v467, %v469
        %v471 = vrot.slane %v382, %v470
        %v473 = vunpack.c.l.s4 1983009808
        %v474 = vunpack.c.0.s8 %v473
        %v475 = vlaneseq
        %v476 = vshrl.u32 %v475, 7
        %v477 = vsub.s32 %v474, %v476
        %v478 = vrot.slane %v464, %v477
        %v479 = vcombine.low %v456, %v471
        %v480 = vcombine.high %v456, %v471
        %v482 = vunpack.c.l.s4 1934713408
        %v483 = vunpack.c.0.s8 %v482
        %v484 = vlaneseq
        %v485 = vshrl.u32 %v484, 7
        %v486 = vsub.s32 %v483, %v485
        %v487 = vrot.slane %v479, %v486
        %v489 = vunpack.c.l.s4 1934713408
        %v490 = vunpack.c.0.s8 %v489
        %v491 = vlaneseq
        %v492 = vshrl.u32 %v491, 7
        %v493 = vsub.s32 %v490, %v492
        %v494 = vrot.slane %v480, %v493
        %v495 = vcombine.low %v463, %v478
        %v496 = vcombine.high %v463, %v478
        %v498 = vunpack.c.l.s4 1934713408
        %v499 = vunpack.c.0.s8 %v498
        %v500 = vlaneseq
        %v501 = vshrl.u32 %v500, 7
        %v502 = vsub.s32 %v499, %v501
        %v503 = vrot.slane %v495, %v502
        %v505 = vunpack.c.l.s4 1934713408
        %v506 = vunpack.c.0.s8 %v505
        %v507 = vlaneseq
        %v508 = vshrl.u32 %v507, 7
        %v509 = vsub.s32 %v506, %v508
        %v510 = vrot.slane %v496, %v509
        %v511 = vcombine.high %v487, 0.0
        %v512 = vcombine.high %v494, 0.0
        %v513 = vcombine.high %v503, 0.0
        %v514 = vcombine.high %v510, 0.0
        %vm515 = vcmask 123904
        %v516 = vsel %vm515, %v421, 0.0
        %517 = vadd.xlane.f32.xlu0 %v516
        %v518 = vpop.xlane.xlu0 %517
        %v519 = vsel %vm515, %v445, 0.0
        %520 = vadd.xlane.f32.xlu0 %v519
        %v521 = vpop.xlane.xlu0 %520
        %v522 = vsel %vm515, %v428, 0.0
        %523 = vadd.xlane.f32.xlu0 %v522
        %v524 = vpop.xlane.xlu0 %523
        %v525 = vsel %vm515, %v446, 0.0
        %526 = vadd.xlane.f32.xlu0 %v525
        %v527 = vpop.xlane.xlu0 %526
        %v528 = vsel %vm515, %v437, 0.0
        %529 = vadd.xlane.f32.xlu0 %v528
        %v530 = vpop.xlane.xlu0 %529
        %v531 = vsel %vm515, %v447, 0.0
        %532 = vadd.xlane.f32.xlu0 %v531
        %v533 = vpop.xlane.xlu0 %532
        %v534 = vsel %vm515, %v444, 0.0
        %535 = vadd.xlane.f32.xlu0 %v534
        %v536 = vpop.xlane.xlu0 %535
        %v537 = vsel %vm515, %v448, 0.0
        %538 = vadd.xlane.f32.xlu0 %v537
        %v539 = vpop.xlane.xlu0 %538
        %v540 = vsel %vm515, %v487, 0.0
        %541 = vadd.xlane.f32.xlu0 %v540
        %v542 = vpop.xlane.xlu0 %541
        %v543 = vsel %vm515, %v511, 0.0
        %544 = vadd.xlane.f32.xlu0 %v543
        %v545 = vpop.xlane.xlu0 %544
        %v546 = vsel %vm515, %v494, 0.0
        %547 = vadd.xlane.f32.xlu0 %v546
        %v548 = vpop.xlane.xlu0 %547
        %v549 = vsel %vm515, %v512, 0.0
        %550 = vadd.xlane.f32.xlu0 %v549
        %v551 = vpop.xlane.xlu0 %550
        %v552 = vsel %vm515, %v503, 0.0
        %553 = vadd.xlane.f32.xlu0 %v552
        %v554 = vpop.xlane.xlu0 %553
        %v555 = vsel %vm515, %v513, 0.0
        %556 = vadd.xlane.f32.xlu0 %v555
        %v557 = vpop.xlane.xlu0 %556
        %v558 = vsel %vm515, %v510, 0.0
        %559 = vadd.xlane.f32.xlu0 %v558
        %v560 = vpop.xlane.xlu0 %559
        %v561 = vsel %vm515, %v514, 0.0
        %562 = vadd.xlane.f32.xlu0 %v561
        %v563 = vpop.xlane.xlu0 %562
        %v564 = vrcp.pop 16.0
        %v565 = vmul.f32 %v518, %v564
        %v566 = vmul.f32 %v521, %v564
        %v567 = vmul.f32 %v524, %v564
        %v568 = vmul.f32 %v527, %v564
        %v569 = vmul.f32 %v530, %v564
        %v570 = vmul.f32 %v533, %v564
        %v571 = vmul.f32 %v536, %v564
        %v572 = vmul.f32 %v539, %v564
        %v573 = vmul.f32 %v542, %v564
        %v574 = vmul.f32 %v545, %v564
        %v575 = vmul.f32 %v548, %v564
        %v576 = vmul.f32 %v551, %v564
        %v577 = vmul.f32 %v554, %v564
        %v578 = vmul.f32 %v557, %v564
        %v579 = vmul.f32 %v560, %v564
        %v580 = vmul.f32 %v563, %v564
        %v581 = vld [vmem:[%s1] sm:$0xff]
        %v582 = vld [vmem:[%s1 + $0x8] sm:$0xff]
        %599 = vrot.lane.b32.xlu0 %v421, 1
        %v600 = vpop.permute.xlu0 %599
        %601 = vrot.lane.b32.xlu0 %v445, 1
        %v602 = vpop.permute.xlu0 %601
        %603 = vrot.lane.b32.xlu0 %v428, 1
        %v604 = vpop.permute.xlu0 %603
        %605 = vrot.lane.b32.xlu0 %v446, 1
        %v606 = vpop.permute.xlu0 %605
        %607 = vrot.lane.b32.xlu0 %v437, 1
        %v608 = vpop.permute.xlu0 %607
        %609 = vrot.lane.b32.xlu0 %v447, 1
        %v610 = vpop.permute.xlu0 %609
        %611 = vrot.lane.b32.xlu0 %v444, 1
        %v612 = vpop.permute.xlu0 %611
        %613 = vrot.lane.b32.xlu0 %v448, 1
        %v614 = vpop.permute.xlu0 %613
        %615 = vrot.lane.b32.xlu0 %v487, 1
        %v616 = vpop.permute.xlu0 %615
        %617 = vrot.lane.b32.xlu0 %v511, 1
        %v618 = vpop.permute.xlu0 %617
        %619 = vrot.lane.b32.xlu0 %v494, 1
        %v620 = vpop.permute.xlu0 %619
        %621 = vrot.lane.b32.xlu0 %v512, 1
        %v622 = vpop.permute.xlu0 %621
        %623 = vrot.lane.b32.xlu0 %v503, 1
        %v624 = vpop.permute.xlu0 %623
        %625 = vrot.lane.b32.xlu0 %v513, 1
        %v626 = vpop.permute.xlu0 %625
        %627 = vrot.lane.b32.xlu0 %v510, 1
        %v628 = vpop.permute.xlu0 %627
        %629 = vrot.lane.b32.xlu0 %v514, 1
        %v630 = vpop.permute.xlu0 %629
        %vm647 = vcmask 7168
        %v648 = vsel %vm647, %v565, %v600
        %v649 = vsel %vm647, %v566, %v602
        %v650 = vsel %vm647, %v567, %v604
        %v651 = vsel %vm647, %v568, %v606
        %v652 = vsel %vm647, %v569, %v608
        %v653 = vsel %vm647, %v570, %v610
        %v654 = vsel %vm647, %v571, %v612
        %v655 = vsel %vm647, %v572, %v614
        %v656 = vsel %vm647, %v573, %v616
        %v657 = vsel %vm647, %v574, %v618
        %v658 = vsel %vm647, %v575, %v620
        %v659 = vsel %vm647, %v576, %v622
        %v660 = vsel %vm647, %v577, %v624
        %v661 = vsel %vm647, %v578, %v626
        %v662 = vsel %vm647, %v579, %v628
        %v663 = vsel %vm647, %v580, %v630
        %v666 = vcombine.high %v581, %v581
        %v668 = vunpack.c.l.s4 1966171168
        %v669 = vunpack.c.0.s8 %v668
        %v670 = vlaneseq
        %v671 = vshrl.u32 %v670, 7
        %v672 = vsub.s32 %v669, %v671
        %v673 = vrot.slane %v581, %v672
        %v675 = vunpack.c.l.s4 1966171168
        %v676 = vunpack.c.0.s8 %v675
        %v677 = vlaneseq
        %v678 = vshrl.u32 %v677, 7
        %v679 = vsub.s32 %v676, %v678
        %v680 = vrot.slane %v666, %v679
        %v681 = vcombine.high %v673, %v673
        %v682 = vcombine.high %v680, %v680
        %v684 = vunpack.c.l.s4 1966171168
        %v685 = vunpack.c.0.s8 %v684
        %v686 = vlaneseq
        %v687 = vshrl.u32 %v686, 7
        %v688 = vsub.s32 %v685, %v687
        %v689 = vrot.slane %v673, %v688
        %v691 = vunpack.c.l.s4 1966171168
        %v692 = vunpack.c.0.s8 %v691
        %v693 = vlaneseq
        %v694 = vshrl.u32 %v693, 7
        %v695 = vsub.s32 %v692, %v694
        %v696 = vrot.slane %v680, %v695
        %v698 = vunpack.c.l.s4 1966171168
        %v699 = vunpack.c.0.s8 %v698
        %v700 = vlaneseq
        %v701 = vshrl.u32 %v700, 7
        %v702 = vsub.s32 %v699, %v701
        %v703 = vrot.slane %v681, %v702
        %v705 = vunpack.c.l.s4 1966171168
        %v706 = vunpack.c.0.s8 %v705
        %v707 = vlaneseq
        %v708 = vshrl.u32 %v707, 7
        %v709 = vsub.s32 %v706, %v708
        %v710 = vrot.slane %v682, %v709
        %v711 = vcombine.high %v689, %v689
        %v712 = vcombine.high %v696, %v696
        %v713 = vcombine.high %v703, %v703
        %v714 = vcombine.high %v710, %v710
        %v715 = vcombine.high %v582, %v582
        %v717 = vunpack.c.l.s4 1966171168
        %v718 = vunpack.c.0.s8 %v717
        %v719 = vlaneseq
        %v720 = vshrl.u32 %v719, 7
        %v721 = vsub.s32 %v718, %v720
        %v722 = vrot.slane %v582, %v721
        %v724 = vunpack.c.l.s4 1966171168
        %v725 = vunpack.c.0.s8 %v724
        %v726 = vlaneseq
        %v727 = vshrl.u32 %v726, 7
        %v728 = vsub.s32 %v725, %v727
        %v729 = vrot.slane %v715, %v728
        %v730 = vcombine.high %v722, %v722
        %v731 = vcombine.high %v729, %v729
        %v733 = vunpack.c.l.s4 1966171168
        %v734 = vunpack.c.0.s8 %v733
        %v735 = vlaneseq
        %v736 = vshrl.u32 %v735, 7
        %v737 = vsub.s32 %v734, %v736
        %v738 = vrot.slane %v722, %v737
        %v740 = vunpack.c.l.s4 1966171168
        %v741 = vunpack.c.0.s8 %v740
        %v742 = vlaneseq
        %v743 = vshrl.u32 %v742, 7
        %v744 = vsub.s32 %v741, %v743
        %v745 = vrot.slane %v729, %v744
        %v747 = vunpack.c.l.s4 1966171168
        %v748 = vunpack.c.0.s8 %v747
        %v749 = vlaneseq
        %v750 = vshrl.u32 %v749, 7
        %v751 = vsub.s32 %v748, %v750
        %v752 = vrot.slane %v730, %v751
        %v754 = vunpack.c.l.s4 1966171168
        %v755 = vunpack.c.0.s8 %v754
        %v756 = vlaneseq
        %v757 = vshrl.u32 %v756, 7
        %v758 = vsub.s32 %v755, %v757
        %v759 = vrot.slane %v731, %v758
        %v760 = vcombine.high %v738, %v738
        %v761 = vcombine.high %v745, %v745
        %v762 = vcombine.high %v752, %v752
        %v763 = vcombine.high %v759, %v759
        %v764 = vlaneseq
        %v765 = vshrl.u32 %v764, 7
        %v766 = vsub.s32 0, %v765
        %v767 = vrot.slane %v689, %v766
        %v768 = vlaneseq
        %v769 = vshrl.u32 %v768, 7
        %v770 = vsub.s32 0, %v769
        %v771 = vrot.slane %v703, %v770
        %v772 = vlaneseq
        %v773 = vshrl.u32 %v772, 7
        %v774 = vsub.s32 0, %v773
        %v775 = vrot.slane %v711, %v774
        %v776 = vlaneseq
        %v777 = vshrl.u32 %v776, 7
        %v778 = vsub.s32 0, %v777
        %v779 = vrot.slane %v713, %v778
        %v780 = vlaneseq
        %v781 = vshrl.u32 %v780, 7
        %v782 = vsub.s32 0, %v781
        %v783 = vrot.slane %v696, %v782
        %v784 = vlaneseq
        %v785 = vshrl.u32 %v784, 7
        %v786 = vsub.s32 0, %v785
        %v787 = vrot.slane %v710, %v786
        %v788 = vlaneseq
        %v789 = vshrl.u32 %v788, 7
        %v790 = vsub.s32 0, %v789
        %v791 = vrot.slane %v712, %v790
        %v792 = vlaneseq
        %v793 = vshrl.u32 %v792, 7
        %v794 = vsub.s32 0, %v793
        %v795 = vrot.slane %v714, %v794
        %v796 = vlaneseq
        %v797 = vshrl.u32 %v796, 7
        %v798 = vsub.s32 0, %v797
        %v799 = vrot.slane %v738, %v798
        %v800 = vlaneseq
        %v801 = vshrl.u32 %v800, 7
        %v802 = vsub.s32 0, %v801
        %v803 = vrot.slane %v752, %v802
        %v804 = vlaneseq
        %v805 = vshrl.u32 %v804, 7
        %v806 = vsub.s32 0, %v805
        %v807 = vrot.slane %v760, %v806
        %v808 = vlaneseq
        %v809 = vshrl.u32 %v808, 7
        %v810 = vsub.s32 0, %v809
        %v811 = vrot.slane %v762, %v810
        %v812 = vlaneseq
        %v813 = vshrl.u32 %v812, 7
        %v814 = vsub.s32 0, %v813
        %v815 = vrot.slane %v745, %v814
        %v816 = vlaneseq
        %v817 = vshrl.u32 %v816, 7
        %v818 = vsub.s32 0, %v817
        %v819 = vrot.slane %v759, %v818
        %v820 = vlaneseq
        %v821 = vshrl.u32 %v820, 7
        %v822 = vsub.s32 0, %v821
        %v823 = vrot.slane %v761, %v822
        %v824 = vlaneseq
        %v825 = vshrl.u32 %v824, 7
        %v826 = vsub.s32 0, %v825
        %v827 = vrot.slane %v763, %v826
        %v844 = vadd.f32 %v648, %v767
        %v845 = vadd.f32 %v649, %v771
        %v846 = vadd.f32 %v650, %v775
        %v847 = vadd.f32 %v651, %v779
        %v848 = vadd.f32 %v652, %v783
        %v849 = vadd.f32 %v653, %v787
        %v850 = vadd.f32 %v654, %v791
        %v851 = vadd.f32 %v655, %v795
        %v852 = vadd.f32 %v656, %v799
        %v853 = vadd.f32 %v657, %v803
        %v854 = vadd.f32 %v658, %v807
        %v855 = vadd.f32 %v659, %v811
        %v856 = vadd.f32 %v660, %v815
        %v857 = vadd.f32 %v661, %v819
        %v858 = vadd.f32 %v662, %v823
        %v859 = vadd.f32 %v663, %v827
        %v860 = vcombine.low %v844, %v846
        %v862 = vunpack.c.l.s4 1983009808
        %v863 = vunpack.c.0.s8 %v862
        %v864 = vlaneseq
        %v865 = vshrl.u32 %v864, 7
        %v866 = vsub.s32 %v863, %v865
        %v867 = vrot.slane %v860, %v866
        %v868 = vcombine.low %v845, %v847
        %v870 = vunpack.c.l.s4 1983009808
        %v871 = vunpack.c.0.s8 %v870
        %v872 = vlaneseq
        %v873 = vshrl.u32 %v872, 7
        %v874 = vsub.s32 %v871, %v873
        %v875 = vrot.slane %v868, %v874
        %v876 = vcombine.low %v848, %v850
        %v878 = vunpack.c.l.s4 1983009808
        %v879 = vunpack.c.0.s8 %v878
        %v880 = vlaneseq
        %v881 = vshrl.u32 %v880, 7
        %v882 = vsub.s32 %v879, %v881
        %v883 = vrot.slane %v876, %v882
        %v884 = vcombine.low %v849, %v851
        %v886 = vunpack.c.l.s4 1983009808
        %v887 = vunpack.c.0.s8 %v886
        %v888 = vlaneseq
        %v889 = vshrl.u32 %v888, 7
        %v890 = vsub.s32 %v887, %v889
        %v891 = vrot.slane %v884, %v890
        %v892 = vcombine.low %v867, %v875
        %v894 = vunpack.c.l.s4 1934713408
        %v895 = vunpack.c.0.s8 %v894
        %v896 = vlaneseq
        %v897 = vshrl.u32 %v896, 7
        %v898 = vsub.s32 %v895, %v897
        %v899 = vrot.slane %v892, %v898
        %v900 = vcombine.low %v883, %v891
        %v902 = vunpack.c.l.s4 1934713408
        %v903 = vunpack.c.0.s8 %v902
        %v904 = vlaneseq
        %v905 = vshrl.u32 %v904, 7
        %v906 = vsub.s32 %v903, %v905
        %v907 = vrot.slane %v900, %v906
        %v908 = vcombine.low %v899, %v907
        %v909 = vcombine.high %v899, %v907
        %v910 = vcombine.low %v852, %v854
        %v912 = vunpack.c.l.s4 1983009808
        %v913 = vunpack.c.0.s8 %v912
        %v914 = vlaneseq
        %v915 = vshrl.u32 %v914, 7
        %v916 = vsub.s32 %v913, %v915
        %v917 = vrot.slane %v910, %v916
        %v918 = vcombine.low %v853, %v855
        %v920 = vunpack.c.l.s4 1983009808
        %v921 = vunpack.c.0.s8 %v920
        %v922 = vlaneseq
        %v923 = vshrl.u32 %v922, 7
        %v924 = vsub.s32 %v921, %v923
        %v925 = vrot.slane %v918, %v924
        %v926 = vcombine.low %v856, %v858
        %v928 = vunpack.c.l.s4 1983009808
        %v929 = vunpack.c.0.s8 %v928
        %v930 = vlaneseq
        %v931 = vshrl.u32 %v930, 7
        %v932 = vsub.s32 %v929, %v931
        %v933 = vrot.slane %v926, %v932
        %v934 = vcombine.low %v857, %v859
        %v936 = vunpack.c.l.s4 1983009808
        %v937 = vunpack.c.0.s8 %v936
        %v938 = vlaneseq
        %v939 = vshrl.u32 %v938, 7
        %v940 = vsub.s32 %v937, %v939
        %v941 = vrot.slane %v934, %v940
        %v942 = vcombine.low %v917, %v925
        %v944 = vunpack.c.l.s4 1934713408
        %v945 = vunpack.c.0.s8 %v944
        %v946 = vlaneseq
        %v947 = vshrl.u32 %v946, 7
        %v948 = vsub.s32 %v945, %v947
        %v949 = vrot.slane %v942, %v948
        %v950 = vcombine.low %v933, %v941
        %v952 = vunpack.c.l.s4 1934713408
        %v953 = vunpack.c.0.s8 %v952
        %v954 = vlaneseq
        %v955 = vshrl.u32 %v954, 7
        %v956 = vsub.s32 %v953, %v955
        %v957 = vrot.slane %v950, %v956
        %v958 = vcombine.low %v949, %v957
        %v959 = vcombine.high %v949, %v957
        %962 = vrot.lane.b32.xlu0 %v909, 17
        %v963 = vpop.permute.xlu0 %962
        %964 = vrot.lane.b32.xlu0 %v959, 17
        %v965 = vpop.permute.xlu0 %964
        %vm968 = vcmask 138240
        %v969 = vsel %vm968, %v908, %v963
        %v970 = vsel %vm968, %v958, %v965
        %v971 = vld [vmem:[%s3] sm:$0xff]
        %v972 = vld [vmem:[%s3 + $0x8] sm:$0xff]
        %v973 = vld [vmem:[%s6] sm:$0xff]
        %v974 = vld [vmem:[%s6 + $0x8] sm:$0xff]
        %976 = vset.pattern.permute.xlu0 0
        %977 = vperm.xlu0 %976, %v973
        %v978 = vpop.permute.xlu0 %977
        %981 = vset.pattern.permute.xlu0 0
        %982 = vperm.xlu0 %981, %v974
        %v983 = vpop.permute.xlu0 %982
        %vm985 = vcmask 130048
        %v987 = vsel %vm985, %v971, 0
        %v990 = vsel %vm985, %v972, 0
        %992 = vmatprep.subr.mxu0 0.0
        %993 = vmatpush1.msra.mxu0 0.0
        %994 = vmatprep.subr.mxu0 0.0
        %995 = vmatpush1.msra.mxu0 0.0
        %996 = vmatprep.subr.mxu0 0.0
        %997 = vmatpush1.msra.mxu0 0.0
        %998 = vmatprep.subr.mxu0 0.0
        %999 = vmatpush1.msra.mxu0 0.0
        %1000 = vmatprep.subr.mxu0 0.0
        %1001 = vmatpush1.msra.mxu0 0.0
        %1002 = vmatprep.subr.mxu0 0.0
        %1003 = vmatpush1.msra.mxu0 0.0
        %1004 = vmatprep.subr.mxu0 0.0
        %1005 = vmatpush1.msra.mxu0 0.0
        %1006 = vmatprep.subr.mxu0 0.0
        %1007 = vmatpush1.msra.mxu0 0.0
        %1008 = vmatprep.subr.mxu0 0.0
        %1009 = vmatpush1.msra.mxu0 0.0
        %1010 = vmatprep.subr.mxu0 0.0
        %1011 = vmatpush1.msra.mxu0 0.0
        %1012 = vmatprep.subr.mxu0 0.0
        %1013 = vmatpush1.msra.mxu0 0.0
        %1014 = vmatprep.subr.mxu0 0.0
        %1015 = vmatpush1.msra.mxu0 0.0
        %1016 = vmatprep.subr.mxu0 0.0
        %1017 = vmatpush1.msra.mxu0 0.0
        %1018 = vmatprep.subr.mxu0 0.0
        %1019 = vmatpush1.msra.mxu0 0.0
        %1020 = vmatprep.subr.mxu0 0.0
        %1021 = vmatpush1.msra.mxu0 %v970
        %1022 = vmatprep.subr.mxu0 0.0
        %1023 = vmatpush1.msra.mxu0 %v969
        %1024 = vmatprep.subr.mxu0 0.0
        %1025 = vmatpush2.msra.mxu0 0.0
        %1026 = vmatprep.subr.mxu0 0.0
        %1027 = vmatpush2.msra.mxu0 0.0
        %1028 = vmatprep.subr.mxu0 0.0
        %1029 = vmatpush2.msra.mxu0 0.0
        %1030 = vmatprep.subr.mxu0 0.0
        %1031 = vmatpush2.msra.mxu0 0.0
        %1032 = vmatprep.subr.mxu0 0.0
        %1033 = vmatpush2.msra.mxu0 0.0
        %1034 = vmatprep.subr.mxu0 0.0
        %1035 = vmatpush2.msra.mxu0 0.0
        %1036 = vmatprep.subr.mxu0 0.0
        %1037 = vmatpush2.msra.mxu0 0.0
        %1038 = vmatprep.subr.mxu0 0.0
        %1039 = vmatpush2.msra.mxu0 0.0
        %1040 = vmatprep.subr.mxu0 0.0
        %1041 = vmatpush2.msra.mxu0 0.0
        %1042 = vmatprep.subr.mxu0 0.0
        %1043 = vmatpush2.msra.mxu0 0.0
        %1044 = vmatprep.subr.mxu0 0.0
        %1045 = vmatpush2.msra.mxu0 0.0
        %1046 = vmatprep.subr.mxu0 0.0
        %1047 = vmatpush2.msra.mxu0 0.0
        %1048 = vmatprep.subr.mxu0 0.0
        %1049 = vmatpush2.msra.mxu0 0.0
        %1050 = vmatprep.subr.mxu0 0.0
        %1051 = vmatpush2.msra.mxu0 0.0
        %1052 = vmatprep.subr.mxu0 0.0
        %1053 = vmatpush2.msra.mxu0 0.0
        %1054 = vmatprep.subr.mxu0 0.0
        %1055 = vmatpush2.msra.mxu0 0.0
        %1056 = vmatprep.mubr.f32.mxu0 0.0
        %1057 = vmatmul.mubr.f32.gmra.mxu0 %v987
        %v1058 = vpop.f32.mrf.mxu0
        %v1059 = vadd.f32 %v978, %v1058
        %v1060 = vpop.f32.mrf.mxu0
        %1061 = vmatprep.mubr.f32.mxu0 0.0
        %1062 = vmatmul.mubr.f32.gmra.mxu0 %v990
        %v1063 = vpop.f32.mrf.mxu0
        %v1064 = vadd.f32 %v983, %v1063
        %v1065 = vpop.f32.mrf.mxu0
        %1066 = vdwg.mxu0
        %v1067 = vld [vmem:[#allocation2] sm:$0xff]
        %v1068 = vld [vmem:[#allocation2 + $0x8] sm:$0xff]
        %v1069 = vld [vmem:[%s7] sm:$0xff]
        %v1070 = vld [vmem:[%s7 + $0x8] sm:$0xff]
        %1072 = vset.pattern.permute.xlu0 0
        %1073 = vperm.xlu0 %1072, %v1069
        %v1074 = vpop.permute.xlu0 %1073
        %1077 = vset.pattern.permute.xlu0 0
        %1078 = vperm.xlu0 %1077, %v1070
        %v1079 = vpop.permute.xlu0 %1078
        %v1082 = vsel %vm985, %v1067, 0
        %v1085 = vsel %vm985, %v1068, 0
        %1087 = vmatprep.subr.mxu0 0.0
        %1088 = vmatpush1.msra.mxu0 0.0
        %1089 = vmatprep.subr.mxu0 0.0
        %1090 = vmatpush1.msra.mxu0 0.0
        %1091 = vmatprep.subr.mxu0 0.0
        %1092 = vmatpush1.msra.mxu0 0.0
        %1093 = vmatprep.subr.mxu0 0.0
        %1094 = vmatpush1.msra.mxu0 0.0
        %1095 = vmatprep.subr.mxu0 0.0
        %1096 = vmatpush1.msra.mxu0 0.0
        %1097 = vmatprep.subr.mxu0 0.0
        %1098 = vmatpush1.msra.mxu0 0.0
        %1099 = vmatprep.subr.mxu0 0.0
        %1100 = vmatpush1.msra.mxu0 0.0
        %1101 = vmatprep.subr.mxu0 0.0
        %1102 = vmatpush1.msra.mxu0 0.0
        %1103 = vmatprep.subr.mxu0 0.0
        %1104 = vmatpush1.msra.mxu0 0.0
        %1105 = vmatprep.subr.mxu0 0.0
        %1106 = vmatpush1.msra.mxu0 0.0
        %1107 = vmatprep.subr.mxu0 0.0
        %1108 = vmatpush1.msra.mxu0 0.0
        %1109 = vmatprep.subr.mxu0 0.0
        %1110 = vmatpush1.msra.mxu0 0.0
        %1111 = vmatprep.subr.mxu0 0.0
        %1112 = vmatpush1.msra.mxu0 0.0
        %1113 = vmatprep.subr.mxu0 0.0
        %1114 = vmatpush1.msra.mxu0 0.0
        %1115 = vmatprep.subr.mxu0 0.0
        %1116 = vmatpush1.msra.mxu0 %v970
        %1117 = vmatprep.subr.mxu0 0.0
        %1118 = vmatpush1.msra.mxu0 %v969
        %1119 = vmatprep.subr.mxu0 0.0
        %1120 = vmatpush2.msra.mxu0 0.0
        %1121 = vmatprep.subr.mxu0 0.0
        %1122 = vmatpush2.msra.mxu0 0.0
        %1123 = vmatprep.subr.mxu0 0.0
        %1124 = vmatpush2.msra.mxu0 0.0
        %1125 = vmatprep.subr.mxu0 0.0
        %1126 = vmatpush2.msra.mxu0 0.0
        %1127 = vmatprep.subr.mxu0 0.0
        %1128 = vmatpush2.msra.mxu0 0.0
        %1129 = vmatprep.subr.mxu0 0.0
        %1130 = vmatpush2.msra.mxu0 0.0
        %1131 = vmatprep.subr.mxu0 0.0
        %1132 = vmatpush2.msra.mxu0 0.0
        %1133 = vmatprep.subr.mxu0 0.0
        %1134 = vmatpush2.msra.mxu0 0.0
        %1135 = vmatprep.subr.mxu0 0.0
        %1136 = vmatpush2.msra.mxu0 0.0
        %1137 = vmatprep.subr.mxu0 0.0
        %1138 = vmatpush2.msra.mxu0 0.0
        %1139 = vmatprep.subr.mxu0 0.0
        %1140 = vmatpush2.msra.mxu0 0.0
        %1141 = vmatprep.subr.mxu0 0.0
        %1142 = vmatpush2.msra.mxu0 0.0
        %1143 = vmatprep.subr.mxu0 0.0
        %1144 = vmatpush2.msra.mxu0 0.0
        %1145 = vmatprep.subr.mxu0 0.0
        %1146 = vmatpush2.msra.mxu0 0.0
        %1147 = vmatprep.subr.mxu0 0.0
        %1148 = vmatpush2.msra.mxu0 0.0
        %1149 = vmatprep.subr.mxu0 0.0
        %1150 = vmatpush2.msra.mxu0 0.0
        %1151 = vmatprep.mubr.f32.mxu0 0.0
        %1152 = vmatmul.mubr.f32.gmra.mxu0 %v1082
        %v1153 = vpop.f32.mrf.mxu0
        %v1154 = vadd.f32 %v1074, %v1153
        %v1155 = vpop.f32.mrf.mxu0
        %1156 = vmatprep.mubr.f32.mxu0 0.0
        %1157 = vmatmul.mubr.f32.gmra.mxu0 %v1085
        %v1158 = vpop.f32.mrf.mxu0
        %v1159 = vadd.f32 %v1079, %v1158
        %v1160 = vpop.f32.mrf.mxu0
        %1161 = vdwg.mxu0
        %1162 = vset.pattern.permute.xlu0 0
        %1163 = vperm.xlu0 %1162, %v581
        %v1164 = vpop.permute.xlu0 %1163
        %1165 = vset.pattern.permute.xlu0 0
        %1166 = vperm.xlu0 %1165, %v582
        %v1167 = vpop.permute.xlu0 %1166
        %v1168 = vlaneseq
        %v1169 = vshrl.u32 %v1168, 7
        %v1170 = vsub.s32 0, %v1169
        %v1171 = vrot.slane %v1164, %v1170
        %v1172 = vlaneseq
        %v1173 = vshrl.u32 %v1172, 7
        %v1174 = vsub.s32 1, %v1173
        %v1175 = vrot.slane %v1164, %v1174
        %v1176 = vlaneseq
        %v1177 = vshrl.u32 %v1176, 7
        %v1178 = vsub.s32 2, %v1177
        %v1179 = vrot.slane %v1164, %v1178
        %v1180 = vlaneseq
        %v1181 = vshrl.u32 %v1180, 7
        %v1182 = vsub.s32 3, %v1181
        %v1183 = vrot.slane %v1164, %v1182
        %v1184 = vlaneseq
        %v1185 = vshrl.u32 %v1184, 7
        %v1186 = vsub.s32 4, %v1185
        %v1187 = vrot.slane %v1164, %v1186
        %v1188 = vlaneseq
        %v1189 = vshrl.u32 %v1188, 7
        %v1190 = vsub.s32 5, %v1189
        %v1191 = vrot.slane %v1164, %v1190
        %v1192 = vlaneseq
        %v1193 = vshrl.u32 %v1192, 7
        %v1194 = vsub.s32 6, %v1193
        %v1195 = vrot.slane %v1164, %v1194
        %v1196 = vlaneseq
        %v1197 = vshrl.u32 %v1196, 7
        %v1198 = vsub.s32 7, %v1197
        %v1199 = vrot.slane %v1164, %v1198
        %v1200 = vlaneseq
        %v1201 = vshrl.u32 %v1200, 7
        %v1202 = vsub.s32 0, %v1201
        %v1203 = vrot.slane %v1167, %v1202
        %v1204 = vlaneseq
        %v1205 = vshrl.u32 %v1204, 7
        %v1206 = vsub.s32 1, %v1205
        %v1207 = vrot.slane %v1167, %v1206
        %v1208 = vlaneseq
        %v1209 = vshrl.u32 %v1208, 7
        %v1210 = vsub.s32 2, %v1209
        %v1211 = vrot.slane %v1167, %v1210
        %v1212 = vlaneseq
        %v1213 = vshrl.u32 %v1212, 7
        %v1214 = vsub.s32 3, %v1213
        %v1215 = vrot.slane %v1167, %v1214
        %v1216 = vlaneseq
        %v1217 = vshrl.u32 %v1216, 7
        %v1218 = vsub.s32 4, %v1217
        %v1219 = vrot.slane %v1167, %v1218
        %v1220 = vlaneseq
        %v1221 = vshrl.u32 %v1220, 7
        %v1222 = vsub.s32 5, %v1221
        %v1223 = vrot.slane %v1167, %v1222
        %v1224 = vlaneseq
        %v1225 = vshrl.u32 %v1224, 7
        %v1226 = vsub.s32 6, %v1225
        %v1227 = vrot.slane %v1167, %v1226
        %v1228 = vlaneseq
        %v1229 = vshrl.u32 %v1228, 7
        %v1230 = vsub.s32 7, %v1229
        %v1231 = vrot.slane %v1167, %v1230
        %v1248 = vadd.f32 %v565, %v1171
        %v1249 = vadd.f32 %v566, %v1175
        %v1250 = vadd.f32 %v567, %v1179
        %v1251 = vadd.f32 %v568, %v1183
        %v1252 = vadd.f32 %v569, %v1187
        %v1253 = vadd.f32 %v570, %v1191
        %v1254 = vadd.f32 %v571, %v1195
        %v1255 = vadd.f32 %v572, %v1199
        %v1256 = vadd.f32 %v573, %v1203
        %v1257 = vadd.f32 %v574, %v1207
        %v1258 = vadd.f32 %v575, %v1211
        %v1259 = vadd.f32 %v576, %v1215
        %v1260 = vadd.f32 %v577, %v1219
        %v1261 = vadd.f32 %v578, %v1223
        %v1262 = vadd.f32 %v579, %v1227
        %v1263 = vadd.f32 %v580, %v1231
        %v1264 = vld [vmem:[%s2] sm:$0xff]
        %v1265 = vld [vmem:[%s2 + $0x8] sm:$0xff]
        %v1266 = vld [vmem:[%s5] sm:$0xff]
        %v1267 = vld [vmem:[%s5 + $0x8] sm:$0xff]
        %1269 = vset.pattern.permute.xlu0 0
        %1270 = vperm.xlu0 %1269, %v1266
        %v1271 = vpop.permute.xlu0 %1270
        %1274 = vset.pattern.permute.xlu0 0
        %1275 = vperm.xlu0 %1274, %v1267
        %v1276 = vpop.permute.xlu0 %1275
        %1294 = vset.pattern.permute.xlu0 0
        %1295 = vperm.xlu0 %1294, %v1248
        %v1296 = vpop.permute.xlu0 %1295
        %1297 = vset.pattern.permute.xlu0 0
        %1298 = vperm.xlu0 %1297, %v1249
        %v1299 = vpop.permute.xlu0 %1298
        %1300 = vset.pattern.permute.xlu0 0
        %1301 = vperm.xlu0 %1300, %v1250
        %v1302 = vpop.permute.xlu0 %1301
        %1303 = vset.pattern.permute.xlu0 0
        %1304 = vperm.xlu0 %1303, %v1251
        %v1305 = vpop.permute.xlu0 %1304
        %1306 = vset.pattern.permute.xlu0 0
        %1307 = vperm.xlu0 %1306, %v1252
        %v1308 = vpop.permute.xlu0 %1307
        %1309 = vset.pattern.permute.xlu0 0
        %1310 = vperm.xlu0 %1309, %v1253
        %v1311 = vpop.permute.xlu0 %1310
        %1312 = vset.pattern.permute.xlu0 0
        %1313 = vperm.xlu0 %1312, %v1254
        %v1314 = vpop.permute.xlu0 %1313
        %1315 = vset.pattern.permute.xlu0 0
        %1316 = vperm.xlu0 %1315, %v1255
        %v1317 = vpop.permute.xlu0 %1316
        %1318 = vset.pattern.permute.xlu0 0
        %1319 = vperm.xlu0 %1318, %v1256
        %v1320 = vpop.permute.xlu0 %1319
        %1321 = vset.pattern.permute.xlu0 0
        %1322 = vperm.xlu0 %1321, %v1257
        %v1323 = vpop.permute.xlu0 %1322
        %1324 = vset.pattern.permute.xlu0 0
        %1325 = vperm.xlu0 %1324, %v1258
        %v1326 = vpop.permute.xlu0 %1325
        %1327 = vset.pattern.permute.xlu0 0
        %1328 = vperm.xlu0 %1327, %v1259
        %v1329 = vpop.permute.xlu0 %1328
        %1330 = vset.pattern.permute.xlu0 0
        %1331 = vperm.xlu0 %1330, %v1260
        %v1332 = vpop.permute.xlu0 %1331
        %1333 = vset.pattern.permute.xlu0 0
        %1334 = vperm.xlu0 %1333, %v1261
        %v1335 = vpop.permute.xlu0 %1334
        %1336 = vset.pattern.permute.xlu0 0
        %1337 = vperm.xlu0 %1336, %v1262
        %v1338 = vpop.permute.xlu0 %1337
        %1339 = vset.pattern.permute.xlu0 0
        %1340 = vperm.xlu0 %1339, %v1263
        %v1341 = vpop.permute.xlu0 %1340
        %v1342 = vlaneseq
        %v1343 = vand.u32 %v1342, 127
        %v1344 = vlaneseq
        %v1345 = vshrl.u32 %v1344, 7
        %v1346 = vsub.s32 %v1343, %v1345
        %v1347 = vrot.slane %v1296, %v1346
        %v1348 = vlaneseq
        %v1349 = vshrl.u32 %v1348, 7
        %v1350 = vsub.s32 %v1343, %v1349
        %v1351 = vrot.slane %v1299, %v1350
        %v1352 = vlaneseq
        %v1353 = vshrl.u32 %v1352, 7
        %v1354 = vsub.s32 %v1343, %v1353
        %v1355 = vrot.slane %v1302, %v1354
        %v1356 = vlaneseq
        %v1357 = vshrl.u32 %v1356, 7
        %v1358 = vsub.s32 %v1343, %v1357
        %v1359 = vrot.slane %v1305, %v1358
        %v1360 = vlaneseq
        %v1361 = vshrl.u32 %v1360, 7
        %v1362 = vsub.s32 %v1343, %v1361
        %v1363 = vrot.slane %v1308, %v1362
        %v1364 = vlaneseq
        %v1365 = vshrl.u32 %v1364, 7
        %v1366 = vsub.s32 %v1343, %v1365
        %v1367 = vrot.slane %v1311, %v1366
        %v1368 = vlaneseq
        %v1369 = vshrl.u32 %v1368, 7
        %v1370 = vsub.s32 %v1343, %v1369
        %v1371 = vrot.slane %v1314, %v1370
        %v1372 = vlaneseq
        %v1373 = vshrl.u32 %v1372, 7
        %v1374 = vsub.s32 %v1343, %v1373
        %v1375 = vrot.slane %v1317, %v1374
        %v1376 = vlaneseq
        %v1377 = vshrl.u32 %v1376, 7
        %v1378 = vsub.s32 %v1343, %v1377
        %v1379 = vrot.slane %v1320, %v1378
        %v1380 = vlaneseq
        %v1381 = vshrl.u32 %v1380, 7
        %v1382 = vsub.s32 %v1343, %v1381
        %v1383 = vrot.slane %v1323, %v1382
        %v1384 = vlaneseq
        %v1385 = vshrl.u32 %v1384, 7
        %v1386 = vsub.s32 %v1343, %v1385
        %v1387 = vrot.slane %v1326, %v1386
        %v1388 = vlaneseq
        %v1389 = vshrl.u32 %v1388, 7
        %v1390 = vsub.s32 %v1343, %v1389
        %v1391 = vrot.slane %v1329, %v1390
        %v1392 = vlaneseq
        %v1393 = vshrl.u32 %v1392, 7
        %v1394 = vsub.s32 %v1343, %v1393
        %v1395 = vrot.slane %v1332, %v1394
        %v1396 = vlaneseq
        %v1397 = vshrl.u32 %v1396, 7
        %v1398 = vsub.s32 %v1343, %v1397
        %v1399 = vrot.slane %v1335, %v1398
        %v1400 = vlaneseq
        %v1401 = vshrl.u32 %v1400, 7
        %v1402 = vsub.s32 %v1343, %v1401
        %v1403 = vrot.slane %v1338, %v1402
        %v1404 = vlaneseq
        %v1405 = vshrl.u32 %v1404, 7
        %v1406 = vsub.s32 %v1343, %v1405
        %v1407 = vrot.slane %v1341, %v1406
        %vm1408 = vcmask 1041409
        %v1409 = vsel %vm1408, %v1351, %v1347
        %vm1410 = vcmask 1042434
        %v1411 = vsel %vm1410, %v1355, %v1409
        %vm1412 = vcmask 1043459
        %v1413 = vsel %vm1412, %v1359, %v1411
        %vm1414 = vcmask 1044484
        %v1415 = vsel %vm1414, %v1363, %v1413
        %vm1416 = vcmask 1045509
        %v1417 = vsel %vm1416, %v1367, %v1415
        %vm1418 = vcmask 1046534
        %v1419 = vsel %vm1418, %v1371, %v1417
        %vm1420 = vcmask 1047559
        %v1421 = vsel %vm1420, %v1375, %v1419
        %v1422 = vsel %vm1408, %v1383, %v1379
        %v1423 = vsel %vm1410, %v1387, %v1422
        %v1424 = vsel %vm1412, %v1391, %v1423
        %v1425 = vsel %vm1414, %v1395, %v1424
        %v1426 = vsel %vm1416, %v1399, %v1425
        %v1427 = vsel %vm1418, %v1403, %v1426
        %v1428 = vsel %vm1420, %v1407, %v1427
        %v1432 = vsel %vm985, %v1264, 0
        %v1435 = vsel %vm985, %v1265, 0
        %1437 = vmatprep.subr.mxu0 0.0
        %1438 = vmatpush1.msra.mxu0 0.0
        %1439 = vmatprep.subr.mxu0 0.0
        %1440 = vmatpush1.msra.mxu0 0.0
        %1441 = vmatprep.subr.mxu0 0.0
        %1442 = vmatpush1.msra.mxu0 0.0
        %1443 = vmatprep.subr.mxu0 0.0
        %1444 = vmatpush1.msra.mxu0 0.0
        %1445 = vmatprep.subr.mxu0 0.0
        %1446 = vmatpush1.msra.mxu0 0.0
        %1447 = vmatprep.subr.mxu0 0.0
        %1448 = vmatpush1.msra.mxu0 0.0
        %1449 = vmatprep.subr.mxu0 0.0
        %1450 = vmatpush1.msra.mxu0 0.0
        %1451 = vmatprep.subr.mxu0 0.0
        %1452 = vmatpush1.msra.mxu0 0.0
        %1453 = vmatprep.subr.mxu0 0.0
        %1454 = vmatpush1.msra.mxu0 0.0
        %1455 = vmatprep.subr.mxu0 0.0
        %1456 = vmatpush1.msra.mxu0 0.0
        %1457 = vmatprep.subr.mxu0 0.0
        %1458 = vmatpush1.msra.mxu0 0.0
        %1459 = vmatprep.subr.mxu0 0.0
        %1460 = vmatpush1.msra.mxu0 0.0
        %1461 = vmatprep.subr.mxu0 0.0
        %1462 = vmatpush1.msra.mxu0 0.0
        %1463 = vmatprep.subr.mxu0 0.0
        %1464 = vmatpush1.msra.mxu0 0.0
        %1465 = vmatprep.subr.mxu0 0.0
        %1466 = vmatpush1.msra.mxu0 %v1428
        %1467 = vmatprep.subr.mxu0 0.0
        %1468 = vmatpush1.msra.mxu0 %v1421
        %1469 = vmatprep.subr.mxu0 0.0
        %1470 = vmatpush2.msra.mxu0 0.0
        %1471 = vmatprep.subr.mxu0 0.0
        %1472 = vmatpush2.msra.mxu0 0.0
        %1473 = vmatprep.subr.mxu0 0.0
        %1474 = vmatpush2.msra.mxu0 0.0
        %1475 = vmatprep.subr.mxu0 0.0
        %1476 = vmatpush2.msra.mxu0 0.0
        %1477 = vmatprep.subr.mxu0 0.0
        %1478 = vmatpush2.msra.mxu0 0.0
        %1479 = vmatprep.subr.mxu0 0.0
        %1480 = vmatpush2.msra.mxu0 0.0
        %1481 = vmatprep.subr.mxu0 0.0
        %1482 = vmatpush2.msra.mxu0 0.0
        %1483 = vmatprep.subr.mxu0 0.0
        %1484 = vmatpush2.msra.mxu0 0.0
        %1485 = vmatprep.subr.mxu0 0.0
        %1486 = vmatpush2.msra.mxu0 0.0
        %1487 = vmatprep.subr.mxu0 0.0
        %1488 = vmatpush2.msra.mxu0 0.0
        %1489 = vmatprep.subr.mxu0 0.0
        %1490 = vmatpush2.msra.mxu0 0.0
        %1491 = vmatprep.subr.mxu0 0.0
        %1492 = vmatpush2.msra.mxu0 0.0
        %1493 = vmatprep.subr.mxu0 0.0
        %1494 = vmatpush2.msra.mxu0 0.0
        %1495 = vmatprep.subr.mxu0 0.0
        %1496 = vmatpush2.msra.mxu0 0.0
        %1497 = vmatprep.subr.mxu0 0.0
        %1498 = vmatpush2.msra.mxu0 0.0
        %1499 = vmatprep.subr.mxu0 0.0
        %1500 = vmatpush2.msra.mxu0 0.0
        %1501 = vmatprep.mubr.f32.mxu0 0.0
        %1502 = vmatmul.mubr.f32.gmra.mxu0 %v1432
        %v1503 = vpop.f32.mrf.mxu0
        %v1504 = vadd.f32 %v1271, %v1503
        %v1505 = vpop.f32.mrf.mxu0
        %1506 = vmatprep.mubr.f32.mxu0 0.0
        %1507 = vmatmul.mubr.f32.gmra.mxu0 %v1435
        %v1508 = vpop.f32.mrf.mxu0
        %v1509 = vadd.f32 %v1276, %v1508
        %v1510 = vpop.f32.mrf.mxu0
        %1511 = vdwg.mxu0
        %v1512 = vmul.f32 %v1504, 0.59460354
        %v1513 = vmul.f32 %v1509, 0.59460354
        %v1514 = vmul.f32 %v1059, 0.59460354
        %v1515 = vmul.f32 %v1064, 0.59460354
        %1518 = vrot.lane.b32.xlu0 %v1514, 111
        %v1519 = vpop.permute.xlu0 %1518
        %1520 = vrot.lane.b32.xlu0 %v1515, 111
        %v1521 = vpop.permute.xlu0 %1520
        %v1524 = vcombine.high %v1514, 0.0
        %v1526 = vunpack.c.l.s4 1983009808
        %v1527 = vunpack.c.0.s8 %v1526
        %v1528 = vlaneseq
        %v1529 = vshrl.u32 %v1528, 7
        %v1530 = vsub.s32 %v1527, %v1529
        %v1531 = vrot.slane %v1514, %v1530
        %v1533 = vunpack.c.l.s4 1983009808
        %v1534 = vunpack.c.0.s8 %v1533
        %v1535 = vlaneseq
        %v1536 = vshrl.u32 %v1535, 7
        %v1537 = vsub.s32 %v1534, %v1536
        %v1538 = vrot.slane %v1524, %v1537
        %v1539 = vcombine.high %v1519, 0.0
        %v1541 = vunpack.c.l.s4 1983009808
        %v1542 = vunpack.c.0.s8 %v1541
        %v1543 = vlaneseq
        %v1544 = vshrl.u32 %v1543, 7
        %v1545 = vsub.s32 %v1542, %v1544
        %v1546 = vrot.slane %v1519, %v1545
        %v1548 = vunpack.c.l.s4 1983009808
        %v1549 = vunpack.c.0.s8 %v1548
        %v1550 = vlaneseq
        %v1551 = vshrl.u32 %v1550, 7
        %v1552 = vsub.s32 %v1549, %v1551
        %v1553 = vrot.slane %v1539, %v1552
        %v1554 = vcombine.low %v1531, %v1546
        %v1555 = vcombine.high %v1531, %v1546
        %v1557 = vunpack.c.l.s4 1934713408
        %v1558 = vunpack.c.0.s8 %v1557
        %v1559 = vlaneseq
        %v1560 = vshrl.u32 %v1559, 7
        %v1561 = vsub.s32 %v1558, %v1560
        %v1562 = vrot.slane %v1554, %v1561
        %v1564 = vunpack.c.l.s4 1934713408
        %v1565 = vunpack.c.0.s8 %v1564
        %v1566 = vlaneseq
        %v1567 = vshrl.u32 %v1566, 7
        %v1568 = vsub.s32 %v1565, %v1567
        %v1569 = vrot.slane %v1555, %v1568
        %v1570 = vcombine.low %v1538, %v1553
        %v1571 = vcombine.high %v1538, %v1553
        %v1573 = vunpack.c.l.s4 1934713408
        %v1574 = vunpack.c.0.s8 %v1573
        %v1575 = vlaneseq
        %v1576 = vshrl.u32 %v1575, 7
        %v1577 = vsub.s32 %v1574, %v1576
        %v1578 = vrot.slane %v1570, %v1577
        %v1580 = vunpack.c.l.s4 1934713408
        %v1581 = vunpack.c.0.s8 %v1580
        %v1582 = vlaneseq
        %v1583 = vshrl.u32 %v1582, 7
        %v1584 = vsub.s32 %v1581, %v1583
        %v1585 = vrot.slane %v1571, %v1584
        %v1586 = vcombine.high %v1562, 0.0
        %v1587 = vcombine.high %v1569, 0.0
        %v1588 = vcombine.high %v1578, 0.0
        %v1589 = vcombine.high %v1585, 0.0
        %v1590 = vcombine.high %v1515, 0.0
        %v1592 = vunpack.c.l.s4 1983009808
        %v1593 = vunpack.c.0.s8 %v1592
        %v1594 = vlaneseq
        %v1595 = vshrl.u32 %v1594, 7
        %v1596 = vsub.s32 %v1593, %v1595
        %v1597 = vrot.slane %v1515, %v1596
        %v1599 = vunpack.c.l.s4 1983009808
        %v1600 = vunpack.c.0.s8 %v1599
        %v1601 = vlaneseq
        %v1602 = vshrl.u32 %v1601, 7
        %v1603 = vsub.s32 %v1600, %v1602
        %v1604 = vrot.slane %v1590, %v1603
        %v1605 = vcombine.high %v1521, 0.0
        %v1607 = vunpack.c.l.s4 1983009808
        %v1608 = vunpack.c.0.s8 %v1607
        %v1609 = vlaneseq
        %v1610 = vshrl.u32 %v1609, 7
        %v1611 = vsub.s32 %v1608, %v1610
        %v1612 = vrot.slane %v1521, %v1611
        %v1614 = vunpack.c.l.s4 1983009808
        %v1615 = vunpack.c.0.s8 %v1614
        %v1616 = vlaneseq
        %v1617 = vshrl.u32 %v1616, 7
        %v1618 = vsub.s32 %v1615, %v1617
        %v1619 = vrot.slane %v1605, %v1618
        %v1620 = vcombine.low %v1597, %v1612
        %v1621 = vcombine.high %v1597, %v1612
        %v1623 = vunpack.c.l.s4 1934713408
        %v1624 = vunpack.c.0.s8 %v1623
        %v1625 = vlaneseq
        %v1626 = vshrl.u32 %v1625, 7
        %v1627 = vsub.s32 %v1624, %v1626
        %v1628 = vrot.slane %v1620, %v1627
        %v1630 = vunpack.c.l.s4 1934713408
        %v1631 = vunpack.c.0.s8 %v1630
        %v1632 = vlaneseq
        %v1633 = vshrl.u32 %v1632, 7
        %v1634 = vsub.s32 %v1631, %v1633
        %v1635 = vrot.slane %v1621, %v1634
        %v1636 = vcombine.low %v1604, %v1619
        %v1637 = vcombine.high %v1604, %v1619
        %v1639 = vunpack.c.l.s4 1934713408
        %v1640 = vunpack.c.0.s8 %v1639
        %v1641 = vlaneseq
        %v1642 = vshrl.u32 %v1641, 7
        %v1643 = vsub.s32 %v1640, %v1642
        %v1644 = vrot.slane %v1636, %v1643
        %v1646 = vunpack.c.l.s4 1934713408
        %v1647 = vunpack.c.0.s8 %v1646
        %v1648 = vlaneseq
        %v1649 = vshrl.u32 %v1648, 7
        %v1650 = vsub.s32 %v1647, %v1649
        %v1651 = vrot.slane %v1637, %v1650
        %v1652 = vcombine.high %v1628, 0.0
        %v1653 = vcombine.high %v1635, 0.0
        %v1654 = vcombine.high %v1644, 0.0
        %v1655 = vcombine.high %v1651, 0.0
        %1658 = vrot.lane.b32.xlu0 %v1154, 111
        %v1659 = vpop.permute.xlu0 %1658
        %1660 = vrot.lane.b32.xlu0 %v1159, 111
        %v1661 = vpop.permute.xlu0 %1660
        %v1664 = vcombine.high %v1154, 0.0
        %v1666 = vunpack.c.l.s4 1983009808
        %v1667 = vunpack.c.0.s8 %v1666
        %v1668 = vlaneseq
        %v1669 = vshrl.u32 %v1668, 7
        %v1670 = vsub.s32 %v1667, %v1669
        %v1671 = vrot.slane %v1154, %v1670
        %v1673 = vunpack.c.l.s4 1983009808
        %v1674 = vunpack.c.0.s8 %v1673
        %v1675 = vlaneseq
        %v1676 = vshrl.u32 %v1675, 7
        %v1677 = vsub.s32 %v1674, %v1676
        %v1678 = vrot.slane %v1664, %v1677
        %v1679 = vcombine.high %v1659, 0.0
        %v1681 = vunpack.c.l.s4 1983009808
        %v1682 = vunpack.c.0.s8 %v1681
        %v1683 = vlaneseq
        %v1684 = vshrl.u32 %v1683, 7
        %v1685 = vsub.s32 %v1682, %v1684
        %v1686 = vrot.slane %v1659, %v1685
        %v1688 = vunpack.c.l.s4 1983009808
        %v1689 = vunpack.c.0.s8 %v1688
        %v1690 = vlaneseq
        %v1691 = vshrl.u32 %v1690, 7
        %v1692 = vsub.s32 %v1689, %v1691
        %v1693 = vrot.slane %v1679, %v1692
        %v1694 = vcombine.low %v1671, %v1686
        %v1695 = vcombine.high %v1671, %v1686
        %v1697 = vunpack.c.l.s4 1934713408
        %v1698 = vunpack.c.0.s8 %v1697
        %v1699 = vlaneseq
        %v1700 = vshrl.u32 %v1699, 7
        %v1701 = vsub.s32 %v1698, %v1700
        %v1702 = vrot.slane %v1694, %v1701
        %v1704 = vunpack.c.l.s4 1934713408
        %v1705 = vunpack.c.0.s8 %v1704
        %v1706 = vlaneseq
        %v1707 = vshrl.u32 %v1706, 7
        %v1708 = vsub.s32 %v1705, %v1707
        %v1709 = vrot.slane %v1695, %v1708
        %v1710 = vcombine.low %v1678, %v1693
        %v1711 = vcombine.high %v1678, %v1693
        %v1713 = vunpack.c.l.s4 1934713408
        %v1714 = vunpack.c.0.s8 %v1713
        %v1715 = vlaneseq
        %v1716 = vshrl.u32 %v1715, 7
        %v1717 = vsub.s32 %v1714, %v1716
        %v1718 = vrot.slane %v1710, %v1717
        %v1720 = vunpack.c.l.s4 1934713408
        %v1721 = vunpack.c.0.s8 %v1720
        %v1722 = vlaneseq
        %v1723 = vshrl.u32 %v1722, 7
        %v1724 = vsub.s32 %v1721, %v1723
        %v1725 = vrot.slane %v1711, %v1724
        %v1726 = vcombine.high %v1702, 0.0
        %v1727 = vcombine.high %v1709, 0.0
        %v1728 = vcombine.high %v1718, 0.0
        %v1729 = vcombine.high %v1725, 0.0
        %v1730 = vcombine.high %v1159, 0.0
        %v1732 = vunpack.c.l.s4 1983009808
        %v1733 = vunpack.c.0.s8 %v1732
        %v1734 = vlaneseq
        %v1735 = vshrl.u32 %v1734, 7
        %v1736 = vsub.s32 %v1733, %v1735
        %v1737 = vrot.slane %v1159, %v1736
        %v1739 = vunpack.c.l.s4 1983009808
        %v1740 = vunpack.c.0.s8 %v1739
        %v1741 = vlaneseq
        %v1742 = vshrl.u32 %v1741, 7
        %v1743 = vsub.s32 %v1740, %v1742
        %v1744 = vrot.slane %v1730, %v1743
        %v1745 = vcombine.high %v1661, 0.0
        %v1747 = vunpack.c.l.s4 1983009808
        %v1748 = vunpack.c.0.s8 %v1747
        %v1749 = vlaneseq
        %v1750 = vshrl.u32 %v1749, 7
        %v1751 = vsub.s32 %v1748, %v1750
        %v1752 = vrot.slane %v1661, %v1751
        %v1754 = vunpack.c.l.s4 1983009808
        %v1755 = vunpack.c.0.s8 %v1754
        %v1756 = vlaneseq
        %v1757 = vshrl.u32 %v1756, 7
        %v1758 = vsub.s32 %v1755, %v1757
        %v1759 = vrot.slane %v1745, %v1758
        %v1760 = vcombine.low %v1737, %v1752
        %v1761 = vcombine.high %v1737, %v1752
        %v1763 = vunpack.c.l.s4 1934713408
        %v1764 = vunpack.c.0.s8 %v1763
        %v1765 = vlaneseq
        %v1766 = vshrl.u32 %v1765, 7
        %v1767 = vsub.s32 %v1764, %v1766
        %v1768 = vrot.slane %v1760, %v1767
        %v1770 = vunpack.c.l.s4 1934713408
        %v1771 = vunpack.c.0.s8 %v1770
        %v1772 = vlaneseq
        %v1773 = vshrl.u32 %v1772, 7
        %v1774 = vsub.s32 %v1771, %v1773
        %v1775 = vrot.slane %v1761, %v1774
        %v1776 = vcombine.low %v1744, %v1759
        %v1777 = vcombine.high %v1744, %v1759
        %v1779 = vunpack.c.l.s4 1934713408
        %v1780 = vunpack.c.0.s8 %v1779
        %v1781 = vlaneseq
        %v1782 = vshrl.u32 %v1781, 7
        %v1783 = vsub.s32 %v1780, %v1782
        %v1784 = vrot.slane %v1776, %v1783
        %v1786 = vunpack.c.l.s4 1934713408
        %v1787 = vunpack.c.0.s8 %v1786
        %v1788 = vlaneseq
        %v1789 = vshrl.u32 %v1788, 7
        %v1790 = vsub.s32 %v1787, %v1789
        %v1791 = vrot.slane %v1777, %v1790
        %v1792 = vcombine.high %v1768, 0.0
        %v1793 = vcombine.high %v1775, 0.0
        %v1794 = vcombine.high %v1784, 0.0
        %v1795 = vcombine.high %v1791, 0.0
        %v1796 = vlaneseq
        %v1797 = vshrl.u32 %v1796, 7
        %v1798 = vsub.s32 0, %v1797
        %v1799 = vrot.slane %v1512, %v1798
        %1801 = vbcast.lane.b32.xlu0 %v1799, 256
        %v1802 = vpop.permute.xlu0 %1801
        %v1803 = vlaneseq
        %v1804 = vshrl.u32 %v1803, 7
        %v1805 = vsub.s32 1, %v1804
        %v1806 = vrot.slane %v1512, %v1805
        %1808 = vbcast.lane.b32.xlu0 %v1806, 256
        %v1809 = vpop.permute.xlu0 %1808
        %v1810 = vlaneseq
        %v1811 = vshrl.u32 %v1810, 7
        %v1812 = vsub.s32 2, %v1811
        %v1813 = vrot.slane %v1512, %v1812
        %1815 = vbcast.lane.b32.xlu0 %v1813, 256
        %v1816 = vpop.permute.xlu0 %1815
        %v1817 = vlaneseq
        %v1818 = vshrl.u32 %v1817, 7
        %v1819 = vsub.s32 3, %v1818
        %v1820 = vrot.slane %v1512, %v1819
        %1822 = vbcast.lane.b32.xlu0 %v1820, 256
        %v1823 = vpop.permute.xlu0 %1822
        %v1824 = vlaneseq
        %v1825 = vshrl.u32 %v1824, 7
        %v1826 = vsub.s32 4, %v1825
        %v1827 = vrot.slane %v1512, %v1826
        %1829 = vbcast.lane.b32.xlu0 %v1827, 256
        %v1830 = vpop.permute.xlu0 %1829
        %v1831 = vlaneseq
        %v1832 = vshrl.u32 %v1831, 7
        %v1833 = vsub.s32 5, %v1832
        %v1834 = vrot.slane %v1512, %v1833
        %1836 = vbcast.lane.b32.xlu0 %v1834, 256
        %v1837 = vpop.permute.xlu0 %1836
        %v1838 = vlaneseq
        %v1839 = vshrl.u32 %v1838, 7
        %v1840 = vsub.s32 6, %v1839
        %v1841 = vrot.slane %v1512, %v1840
        %1843 = vbcast.lane.b32.xlu0 %v1841, 256
        %v1844 = vpop.permute.xlu0 %1843
        %v1845 = vlaneseq
        %v1846 = vshrl.u32 %v1845, 7
        %v1847 = vsub.s32 7, %v1846
        %v1848 = vrot.slane %v1512, %v1847
        %1850 = vbcast.lane.b32.xlu0 %v1848, 256
        %v1851 = vpop.permute.xlu0 %1850
        %v1852 = vlaneseq
        %v1853 = vshrl.u32 %v1852, 7
        %v1854 = vsub.s32 0, %v1853
        %v1855 = vrot.slane %v1513, %v1854
        %1857 = vbcast.lane.b32.xlu0 %v1855, 256
        %v1858 = vpop.permute.xlu0 %1857
        %v1859 = vlaneseq
        %v1860 = vshrl.u32 %v1859, 7
        %v1861 = vsub.s32 1, %v1860
        %v1862 = vrot.slane %v1513, %v1861
        %1864 = vbcast.lane.b32.xlu0 %v1862, 256
        %v1865 = vpop.permute.xlu0 %1864
        %v1866 = vlaneseq
        %v1867 = vshrl.u32 %v1866, 7
        %v1868 = vsub.s32 2, %v1867
        %v1869 = vrot.slane %v1513, %v1868
        %1871 = vbcast.lane.b32.xlu0 %v1869, 256
        %v1872 = vpop.permute.xlu0 %1871
        %v1873 = vlaneseq
        %v1874 = vshrl.u32 %v1873, 7
        %v1875 = vsub.s32 3, %v1874
        %v1876 = vrot.slane %v1513, %v1875
        %1878 = vbcast.lane.b32.xlu0 %v1876, 256
        %v1879 = vpop.permute.xlu0 %1878
        %v1880 = vlaneseq
        %v1881 = vshrl.u32 %v1880, 7
        %v1882 = vsub.s32 4, %v1881
        %v1883 = vrot.slane %v1513, %v1882
        %1885 = vbcast.lane.b32.xlu0 %v1883, 256
        %v1886 = vpop.permute.xlu0 %1885
        %v1887 = vlaneseq
        %v1888 = vshrl.u32 %v1887, 7
        %v1889 = vsub.s32 5, %v1888
        %v1890 = vrot.slane %v1513, %v1889
        %1892 = vbcast.lane.b32.xlu0 %v1890, 256
        %v1893 = vpop.permute.xlu0 %1892
        %v1894 = vlaneseq
        %v1895 = vshrl.u32 %v1894, 7
        %v1896 = vsub.s32 6, %v1895
        %v1897 = vrot.slane %v1513, %v1896
        %1899 = vbcast.lane.b32.xlu0 %v1897, 256
        %v1900 = vpop.permute.xlu0 %1899
        %v1901 = vlaneseq
        %v1902 = vshrl.u32 %v1901, 7
        %v1903 = vsub.s32 7, %v1902
        %v1904 = vrot.slane %v1513, %v1903
        %1906 = vbcast.lane.b32.xlu0 %v1904, 256
        %v1907 = vpop.permute.xlu0 %1906
        %v1908 = vmul.f32 %v1802, %v1562
        %v1909 = vmul.f32 %v1809, %v1586
        %v1910 = vmul.f32 %v1816, %v1569
        %v1911 = vmul.f32 %v1823, %v1587
        %v1912 = vmul.f32 %v1830, %v1578
        %v1913 = vmul.f32 %v1837, %v1588
        %v1914 = vmul.f32 %v1844, %v1585
        %v1915 = vmul.f32 %v1851, %v1589
        %v1916 = vmul.f32 %v1858, %v1628
        %v1917 = vmul.f32 %v1865, %v1652
        %v1918 = vmul.f32 %v1872, %v1635
        %v1919 = vmul.f32 %v1879, %v1653
        %v1920 = vmul.f32 %v1886, %v1644
        %v1921 = vmul.f32 %v1893, %v1654
        %v1922 = vmul.f32 %v1900, %v1651
        %v1923 = vmul.f32 %v1907, %v1655
        %vm1924 = vcmask 132096
        %v1925 = vsel %vm1924, %v1908, 0.0
        %v1926 = vsel %vm1924, %v1909, 0.0
        %v1927 = vadd.f32 %v1925, %v1926
        %v1928 = vsel %vm1924, %v1910, 0.0
        %v1929 = vadd.f32 %v1927, %v1928
        %v1930 = vsel %vm1924, %v1911, 0.0
        %v1931 = vadd.f32 %v1929, %v1930
        %v1932 = vsel %vm1924, %v1912, 0.0
        %v1933 = vadd.f32 %v1931, %v1932
        %v1934 = vsel %vm1924, %v1913, 0.0
        %v1935 = vadd.f32 %v1933, %v1934
        %v1936 = vsel %vm1924, %v1914, 0.0
        %v1937 = vadd.f32 %v1935, %v1936
        %v1938 = vsel %vm1924, %v1915, 0.0
        %v1939 = vadd.f32 %v1937, %v1938
        %v1940 = vsel %vm1924, %v1916, 0.0
        %v1941 = vsel %vm1924, %v1917, 0.0
        %v1942 = vadd.f32 %v1940, %v1941
        %v1943 = vsel %vm1924, %v1918, 0.0
        %v1944 = vadd.f32 %v1942, %v1943
        %v1945 = vsel %vm1924, %v1919, 0.0
        %v1946 = vadd.f32 %v1944, %v1945
        %v1947 = vsel %vm1924, %v1920, 0.0
        %v1948 = vadd.f32 %v1946, %v1947
        %v1949 = vsel %vm1924, %v1921, 0.0
        %v1950 = vadd.f32 %v1948, %v1949
        %v1951 = vsel %vm1924, %v1922, 0.0
        %v1952 = vadd.f32 %v1950, %v1951
        %v1953 = vsel %vm1924, %v1923, 0.0
        %v1954 = vadd.f32 %v1952, %v1953
        %v1955 = vsel %vm1924, %v1939, -inf
        %1956 = vmax.xlane.f32.xlu0 %v1955
        %v1957 = vpop.xlane.xlu0 %1956
        %v1958 = vsel %vm1924, %v1954, -inf
        %1959 = vmax.xlane.f32.xlu0 %v1958
        %v1960 = vpop.xlane.xlu0 %1959
        %v1961 = vsub.f32 %v1939, %v1957
        %v1962 = vsub.f32 %v1954, %v1960
        %v1963 = vmul.f32 %v1961, 1.442695
        %v1964 = vpow.pop %v1963
        %v1965 = vmul.f32 %v1962, 1.442695
        %v1966 = vpow.pop %v1965
        %v1967 = vsel %vm1924, %v1964, 0.0
        %1968 = vadd.xlane.f32.xlu0 %v1967
        %v1969 = vpop.xlane.xlu0 %1968
        %v1970 = vsel %vm1924, %v1966, 0.0
        %1971 = vadd.xlane.f32.xlu0 %v1970
        %v1972 = vpop.xlane.xlu0 %1971
        %v1973 = vrcp.pop %v1969
        %v1974 = vmul.f32 %v1964, %v1973
        %v1975 = vrcp.pop %v1972
        %v1976 = vmul.f32 %v1966, %v1975
        %v1977 = vmul.f32 %v1702, %v1974
        %v1978 = vmul.f32 %v1726, %v1974
        %v1979 = vmul.f32 %v1709, %v1974
        %v1980 = vmul.f32 %v1727, %v1974
        %v1981 = vmul.f32 %v1718, %v1974
        %v1982 = vmul.f32 %v1728, %v1974
        %v1983 = vmul.f32 %v1725, %v1974
        %v1984 = vmul.f32 %v1729, %v1974
        %v1985 = vmul.f32 %v1768, %v1976
        %v1986 = vmul.f32 %v1792, %v1976
        %v1987 = vmul.f32 %v1775, %v1976
        %v1988 = vmul.f32 %v1793, %v1976
        %v1989 = vmul.f32 %v1784, %v1976
        %v1990 = vmul.f32 %v1794, %v1976
        %v1991 = vmul.f32 %v1791, %v1976
        %v1992 = vmul.f32 %v1795, %v1976
        %v1993 = vsel %vm1924, %v1977, 0.0
        %1994 = vadd.xlane.f32.xlu0 %v1993
        %v1995 = vpop.xlane.xlu0 %1994
        %v1996 = vsel %vm1924, %v1978, 0.0
        %1997 = vadd.xlane.f32.xlu0 %v1996
        %v1998 = vpop.xlane.xlu0 %1997
        %v1999 = vsel %vm1924, %v1979, 0.0
        %2000 = vadd.xlane.f32.xlu0 %v1999
        %v2001 = vpop.xlane.xlu0 %2000
        %v2002 = vsel %vm1924, %v1980, 0.0
        %2003 = vadd.xlane.f32.xlu0 %v2002
        %v2004 = vpop.xlane.xlu0 %2003
        %v2005 = vsel %vm1924, %v1981, 0.0
        %2006 = vadd.xlane.f32.xlu0 %v2005
        %v2007 = vpop.xlane.xlu0 %2006
        %v2008 = vsel %vm1924, %v1982, 0.0
        %2009 = vadd.xlane.f32.xlu0 %v2008
        %v2010 = vpop.xlane.xlu0 %2009
        %v2011 = vsel %vm1924, %v1983, 0.0
        %2012 = vadd.xlane.f32.xlu0 %v2011
        %v2013 = vpop.xlane.xlu0 %2012
        %v2014 = vsel %vm1924, %v1984, 0.0
        %2015 = vadd.xlane.f32.xlu0 %v2014
        %v2016 = vpop.xlane.xlu0 %2015
        %v2017 = vsel %vm1924, %v1985, 0.0
        %2018 = vadd.xlane.f32.xlu0 %v2017
        %v2019 = vpop.xlane.xlu0 %2018
        %v2020 = vsel %vm1924, %v1986, 0.0
        %2021 = vadd.xlane.f32.xlu0 %v2020
        %v2022 = vpop.xlane.xlu0 %2021
        %v2023 = vsel %vm1924, %v1987, 0.0
        %2024 = vadd.xlane.f32.xlu0 %v2023
        %v2025 = vpop.xlane.xlu0 %2024
        %v2026 = vsel %vm1924, %v1988, 0.0
        %2027 = vadd.xlane.f32.xlu0 %v2026
        %v2028 = vpop.xlane.xlu0 %2027
        %v2029 = vsel %vm1924, %v1989, 0.0
        %2030 = vadd.xlane.f32.xlu0 %v2029
        %v2031 = vpop.xlane.xlu0 %2030
        %v2032 = vsel %vm1924, %v1990, 0.0
        %2033 = vadd.xlane.f32.xlu0 %v2032
        %v2034 = vpop.xlane.xlu0 %2033
        %v2035 = vsel %vm1924, %v1991, 0.0
        %2036 = vadd.xlane.f32.xlu0 %v2035
        %v2037 = vpop.xlane.xlu0 %2036
        %v2038 = vsel %vm1924, %v1992, 0.0
        %2039 = vadd.xlane.f32.xlu0 %v2038
        %v2040 = vpop.xlane.xlu0 %2039
        %v2041 = vld [vmem:[%s8] sm:$0xff]
        %v2042 = vld [vmem:[%s8 + $0x8] sm:$0xff]
        %v2043 = vld [vmem:[%s8 + $0x10] sm:$0xff]
        %v2044 = vld [vmem:[%s9] sm:$0xff]
        %v2045 = vld [vmem:[%s9 + $0x8] sm:$0xff]
        %v2046 = vld [vmem:[%s9 + $0x10] sm:$0xff]
        %2048 = vset.pattern.permute.xlu0 0
        %2049 = vperm.xlu0 %2048, %v2044
        %v2050 = vpop.permute.xlu0 %2049
        %2053 = vset.pattern.permute.xlu0 0
        %2054 = vperm.xlu0 %2053, %v2045
        %v2055 = vpop.permute.xlu0 %2054
        %2058 = vset.pattern.permute.xlu0 0
        %2059 = vperm.xlu0 %2058, %v2046
        %v2060 = vpop.permute.xlu0 %2059
        %v2078 = vlaneseq
        %v2079 = vshrl.u32 %v2078, 7
        %v2080 = vsub.s32 %v1343, %v2079
        %v2081 = vrot.slane %v1995, %v2080
        %v2082 = vlaneseq
        %v2083 = vshrl.u32 %v2082, 7
        %v2084 = vsub.s32 %v1343, %v2083
        %v2085 = vrot.slane %v1998, %v2084
        %v2086 = vlaneseq
        %v2087 = vshrl.u32 %v2086, 7
        %v2088 = vsub.s32 %v1343, %v2087
        %v2089 = vrot.slane %v2001, %v2088
        %v2090 = vlaneseq
        %v2091 = vshrl.u32 %v2090, 7
        %v2092 = vsub.s32 %v1343, %v2091
        %v2093 = vrot.slane %v2004, %v2092
        %v2094 = vlaneseq
        %v2095 = vshrl.u32 %v2094, 7
        %v2096 = vsub.s32 %v1343, %v2095
        %v2097 = vrot.slane %v2007, %v2096
        %v2098 = vlaneseq
        %v2099 = vshrl.u32 %v2098, 7
        %v2100 = vsub.s32 %v1343, %v2099
        %v2101 = vrot.slane %v2010, %v2100
        %v2102 = vlaneseq
        %v2103 = vshrl.u32 %v2102, 7
        %v2104 = vsub.s32 %v1343, %v2103
        %v2105 = vrot.slane %v2013, %v2104
        %v2106 = vlaneseq
        %v2107 = vshrl.u32 %v2106, 7
        %v2108 = vsub.s32 %v1343, %v2107
        %v2109 = vrot.slane %v2016, %v2108
        %v2110 = vlaneseq
        %v2111 = vshrl.u32 %v2110, 7
        %v2112 = vsub.s32 %v1343, %v2111
        %v2113 = vrot.slane %v2019, %v2112
        %v2114 = vlaneseq
        %v2115 = vshrl.u32 %v2114, 7
        %v2116 = vsub.s32 %v1343, %v2115
        %v2117 = vrot.slane %v2022, %v2116
        %v2118 = vlaneseq
        %v2119 = vshrl.u32 %v2118, 7
        %v2120 = vsub.s32 %v1343, %v2119
        %v2121 = vrot.slane %v2025, %v2120
        %v2122 = vlaneseq
        %v2123 = vshrl.u32 %v2122, 7
        %v2124 = vsub.s32 %v1343, %v2123
        %v2125 = vrot.slane %v2028, %v2124
        %v2126 = vlaneseq
        %v2127 = vshrl.u32 %v2126, 7
        %v2128 = vsub.s32 %v1343, %v2127
        %v2129 = vrot.slane %v2031, %v2128
        %v2130 = vlaneseq
        %v2131 = vshrl.u32 %v2130, 7
        %v2132 = vsub.s32 %v1343, %v2131
        %v2133 = vrot.slane %v2034, %v2132
        %v2134 = vlaneseq
        %v2135 = vshrl.u32 %v2134, 7
        %v2136 = vsub.s32 %v1343, %v2135
        %v2137 = vrot.slane %v2037, %v2136
        %v2138 = vlaneseq
        %v2139 = vshrl.u32 %v2138, 7
        %v2140 = vsub.s32 %v1343, %v2139
        %v2141 = vrot.slane %v2040, %v2140
        %v2142 = vsel %vm1408, %v2085, %v2081
        %v2143 = vsel %vm1410, %v2089, %v2142
        %v2144 = vsel %vm1412, %v2093, %v2143
        %v2145 = vsel %vm1414, %v2097, %v2144
        %v2146 = vsel %vm1416, %v2101, %v2145
        %v2147 = vsel %vm1418, %v2105, %v2146
        %v2148 = vsel %vm1420, %v2109, %v2147
        %v2149 = vsel %vm1408, %v2117, %v2113
        %v2150 = vsel %vm1410, %v2121, %v2149
        %v2151 = vsel %vm1412, %v2125, %v2150
        %v2152 = vsel %vm1414, %v2129, %v2151
        %v2153 = vsel %vm1416, %v2133, %v2152
        %v2154 = vsel %vm1418, %v2137, %v2153
        %v2155 = vsel %vm1420, %v2141, %v2154
        %v2159 = vsel %vm985, %v2041, 0
        %v2162 = vsel %vm985, %v2042, 0
        %v2165 = vsel %vm985, %v2043, 0
        %2167 = vmatprep.subr.mxu0 0.0
        %2168 = vmatpush1.msra.mxu0 0.0
        %2169 = vmatprep.subr.mxu0 0.0
        %2170 = vmatpush1.msra.mxu0 0.0
        %2171 = vmatprep.subr.mxu0 0.0
        %2172 = vmatpush1.msra.mxu0 0.0
        %2173 = vmatprep.subr.mxu0 0.0
        %2174 = vmatpush1.msra.mxu0 0.0
        %2175 = vmatprep.subr.mxu0 0.0
        %2176 = vmatpush1.msra.mxu0 0.0
        %2177 = vmatprep.subr.mxu0 0.0
        %2178 = vmatpush1.msra.mxu0 0.0
        %2179 = vmatprep.subr.mxu0 0.0
        %2180 = vmatpush1.msra.mxu0 0.0
        %2181 = vmatprep.subr.mxu0 0.0
        %2182 = vmatpush1.msra.mxu0 0.0
        %2183 = vmatprep.subr.mxu0 0.0
        %2184 = vmatpush1.msra.mxu0 0.0
        %2185 = vmatprep.subr.mxu0 0.0
        %2186 = vmatpush1.msra.mxu0 0.0
        %2187 = vmatprep.subr.mxu0 0.0
        %2188 = vmatpush1.msra.mxu0 0.0
        %2189 = vmatprep.subr.mxu0 0.0
        %2190 = vmatpush1.msra.mxu0 0.0
        %2191 = vmatprep.subr.mxu0 0.0
        %2192 = vmatpush1.msra.mxu0 0.0
        %2193 = vmatprep.subr.mxu0 0.0
        %2194 = vmatpush1.msra.mxu0 0.0
        %2195 = vmatprep.subr.mxu0 0.0
        %2196 = vmatpush1.msra.mxu0 %v2155
        %2197 = vmatprep.subr.mxu0 0.0
        %2198 = vmatpush1.msra.mxu0 %v2148
        %2199 = vmatprep.subr.mxu0 0.0
        %2200 = vmatpush2.msra.mxu0 0.0
        %2201 = vmatprep.subr.mxu0 0.0
        %2202 = vmatpush2.msra.mxu0 0.0
        %2203 = vmatprep.subr.mxu0 0.0
        %2204 = vmatpush2.msra.mxu0 0.0
        %2205 = vmatprep.subr.mxu0 0.0
        %2206 = vmatpush2.msra.mxu0 0.0
        %2207 = vmatprep.subr.mxu0 0.0
        %2208 = vmatpush2.msra.mxu0 0.0
        %2209 = vmatprep.subr.mxu0 0.0
        %2210 = vmatpush2.msra.mxu0 0.0
        %2211 = vmatprep.subr.mxu0 0.0
        %2212 = vmatpush2.msra.mxu0 0.0
        %2213 = vmatprep.subr.mxu0 0.0
        %2214 = vmatpush2.msra.mxu0 0.0
        %2215 = vmatprep.subr.mxu0 0.0
        %2216 = vmatpush2.msra.mxu0 0.0
        %2217 = vmatprep.subr.mxu0 0.0
        %2218 = vmatpush2.msra.mxu0 0.0
        %2219 = vmatprep.subr.mxu0 0.0
        %2220 = vmatpush2.msra.mxu0 0.0
        %2221 = vmatprep.subr.mxu0 0.0
        %2222 = vmatpush2.msra.mxu0 0.0
        %2223 = vmatprep.subr.mxu0 0.0
        %2224 = vmatpush2.msra.mxu0 0.0
        %2225 = vmatprep.subr.mxu0 0.0
        %2226 = vmatpush2.msra.mxu0 0.0
        %2227 = vmatprep.subr.mxu0 0.0
        %2228 = vmatpush2.msra.mxu0 0.0
        %2229 = vmatprep.subr.mxu0 0.0
        %2230 = vmatpush2.msra.mxu0 0.0
        %2231 = vmatprep.mubr.f32.mxu0 0.0
        %2232 = vmatmul.mubr.f32.gmra.mxu0 %v2159
        %v2233 = vpop.f32.mrf.mxu0
        %v2234 = vadd.f32 %v2050, %v2233
        %v2235 = vpop.f32.mrf.mxu0
        %2236 = vmatprep.mubr.f32.mxu0 0.0
        %2237 = vmatmul.mubr.f32.gmra.mxu0 %v2162
        %v2238 = vpop.f32.mrf.mxu0
        %v2239 = vadd.f32 %v2055, %v2238
        %v2240 = vpop.f32.mrf.mxu0
        %2241 = vmatprep.mubr.f32.mxu0 0.0
        %2242 = vmatmul.mubr.f32.gmra.mxu0 %v2165
        %v2243 = vpop.f32.mrf.mxu0
        %v2244 = vadd.f32 %v2060, %v2243
        %v2245 = vpop.f32.mrf.mxu0
        %2246 = vdwg.mxu0
        %2247 = vxpose.xlu0.b32.start [1/16] %v2234, 128
        %2248 = vxpose.xlu0.b32.cont [2/16] %v2239, 128
        %2249 = vxpose.xlu0.b32.cont [3/16] %v2244, 128
        %2250 = vxpose.xlu0.b32.cont [4/16] 0.0, 128
        %2251 = vxpose.xlu0.b32.cont [5/16] 0.0, 128
        %2252 = vxpose.xlu0.b32.cont [6/16] 0.0, 128
        %2253 = vxpose.xlu0.b32.cont [7/16] 0.0, 128
        %2254 = vxpose.xlu0.b32.cont [8/16] 0.0, 128
        %2255 = vxpose.xlu0.b32.cont [9/16] 0.0, 128
        %2256 = vxpose.xlu0.b32.cont [10/16] 0.0, 128
        %2257 = vxpose.xlu0.b32.cont [11/16] 0.0, 128
        %2258 = vxpose.xlu0.b32.cont [12/16] 0.0, 128
        %2259 = vxpose.xlu0.b32.cont [13/16] 0.0, 128
        %2260 = vxpose.xlu0.b32.cont [14/16] 0.0, 128
        %2261 = vxpose.xlu0.b32.cont [15/16] 0.0, 128
        %2262 = vxpose.xlu0.b32.end [16/16] 0.0, 128
        %v2263 = vpop.trf.xlu0
        %v2264 = vpop.trf.xlu0
        %v2265 = vpop.trf.xlu0
        %v2266 = vpop.trf.xlu0
        %v2267 = vpop.trf.xlu0
        %v2268 = vpop.trf.xlu0
        %v2269 = vpop.trf.xlu0
        %v2270 = vpop.trf.xlu0
        %v2271 = vpop.trf.xlu0
        %v2272 = vpop.trf.xlu0
        %v2273 = vpop.trf.xlu0
        %v2274 = vpop.trf.xlu0
        %v2275 = vpop.trf.xlu0
        %v2276 = vpop.trf.xlu0
        %v2277 = vpop.trf.xlu0
        %v2278 = vpop.trf.xlu0
        %v2281 = vunpack.c.l.s4 1966171168
        %v2282 = vunpack.c.0.s8 %v2281
        %v2283 = vlaneseq
        %v2284 = vshrl.u32 %v2283, 7
        %v2285 = vsub.s32 %v2282, %v2284
        %v2286 = vrot.slane %v2263, %v2285
        %v2287 = vcombine.high %v2286, %v2286
        %v2289 = vunpack.c.l.s4 1966171168
        %v2290 = vunpack.c.0.s8 %v2289
        %v2291 = vlaneseq
        %v2292 = vshrl.u32 %v2291, 7
        %v2293 = vsub.s32 %v2290, %v2292
        %v2294 = vrot.slane %v2286, %v2293
        %v2296 = vunpack.c.l.s4 1966171168
        %v2297 = vunpack.c.0.s8 %v2296
        %v2298 = vlaneseq
        %v2299 = vshrl.u32 %v2298, 7
        %v2300 = vsub.s32 %v2297, %v2299
        %v2301 = vrot.slane %v2287, %v2300
        %vm2304 = vcmask 188416
        %2305 = vst.msk [vmem:[%s370] sm:$0x1] %vm2304, %v2294
        %2306 = vst.msk [vmem:[%s370 + $0x1] sm:$0x1] %vm2304, %v2301
        %s2307 = sand.u32 %s248, 1
        %s2308 = scalar_lea.sflag [#allocation4], %s2307
        %s2309 = sand.u32 %s248, 1
        %s2310 = smul.addr %s2309, 2
        %s2311 = scalar_lea.vmem [#allocation5], %s2310
        // Predicated region
        $region65: #{tpu_custom_call.1} parent=59 // pred_check
          %p2312 = pneg %p258
        $region66: #{tpu_custom_call.1} parent=59 // pred_check_branch
          %2314 = sbr.rel (%p2312) target = $region68
        $region67: #{tpu_custom_call.1} parent=59 // pred_region
          %s2315 = smul.u32 2, %s25
          %s2317 = ssub.s32 32, 32
          %2318 = vsyncadd %s2308, %s2317
          %s2319 = smul.addr %s2315, 16
          %s2320 = scalar_lea.hbm %s10, %s2319
          %s2321 = sshll.u32 %s2311, 4
          %s2322 = int_to_ptr.vmem [resolvable:$true] %s2321
          %2327 = dma.vmem_to_hbm [thread:$0]  %s2322, 32, %s2320, %s2308, 16, 16, 1
        $region68: #{tpu_custom_call.1} parent=59 // pred_fallthru
          _
      $region60: #{tpu_custom_call.1} parent=5 // pred_fallthru
        _
      %p2328 = scmp.le.s32.totalorder 2, %s20
      // Predicated region
      $region69: #{tpu_custom_call.1} parent=5 // pred_check
        %p2329 = pneg %p2328
      $region70: #{tpu_custom_call.1} parent=5 // pred_check_branch
        %2331 = sbr.rel (%p2329) target = $region72
      $region71: #{tpu_custom_call.1} parent=5 // pred_region
        %s2332 = ssub.s32 %s20, 2
        // Predicated region
        $region73: #{tpu_custom_call.1} parent=71 // pred_check
          %p2333 = pneg %p264
        $region74: #{tpu_custom_call.1} parent=71 // pred_check_branch
          %2335 = sbr.rel (%p2333) target = $region76
        $region75: #{tpu_custom_call.1} parent=71 // pred_region
          %s2336 = sand.u32 %s249, 1
          %s2337 = scalar_lea.sflag [#allocation4], %s2336
          %s2338 = sand.u32 %s249, 1
          %s2339 = smul.addr %s2338, 2
          %s2340 = scalar_lea.vmem [#allocation5], %s2339
          %2341 = dma.done %s2337, 32
        $region76: #{tpu_custom_call.1} parent=71 // pred_fallthru
          _
      $region72: #{tpu_custom_call.1} parent=5 // pred_fallthru
        _
    $region6: #{tpu_custom_call.1} parent=1 // loop_footer
      %s24 = sadd.s32 1, %s20
    $region7: #{tpu_custom_call.1} parent=1 // loop_footer_branch
      %19 = sbr.rel target = $region3
    $region8: #{tpu_custom_call.1} parent=1 // loop_exit
      _
    %2342 = vsyncpa [#allocation3], 1
    %s2343 = scalar_lea.sflag [#allocation3], 1
    %2344 = vsyncpa %s2343, 1
    %2345 = vsyncpa [#allocation4], 1
    %s2346 = scalar_lea.sflag [#allocation4], 1
    %2347 = vsyncpa %s2346, 1

</llo_original>
